<compile_context>
chip_gen: v7x
topology: tpu7x:2x2x1
jax: 0.10.0
libtpu: 0.0.40
codegen_flags: <defaults>
</compile_context>

<pallas_src>
import math

import jax
import jax.numpy as jnp
from jax.experimental import pallas as pl
from jax.experimental.pallas import tpu as pltpu

EPS = 1e-5            # LayerNorm eps (matches the reference LayerNorm module)
NEG_INF = -1e30       # finite mask value (keeps the online softmax NaN-free)


def _layernorm(x, gamma, beta):
    # Book-style LayerNorm: mean/var over last dim, biased variance, f32 throughout.
    mean = jnp.mean(x, axis=-1, keepdims=True)
    var = jnp.mean((x - mean) ** 2, axis=-1, keepdims=True)
    return (x - mean) * jax.lax.rsqrt(var + EPS) * gamma + beta


def _gelu(x):
    # GPT-2 tanh-approximation GELU (matches the book's GELU module).
    c = 0.7978845608028654  # sqrt(2/pi)
    return 0.5 * x * (1.0 + jnp.tanh(c * (x + 0.044715 * (x * x * x))))


# ---------------------------------------------------------------------------
# Kernel 1: LN1 + Q/K/V projection, computed exactly once per token.
# ---------------------------------------------------------------------------
def qkv_projection_kernel(x_ref, g1_ref, b1_ref, wq_ref, wk_ref, wv_ref,
                          q_ref, k_ref, v_ref):
    H = q_ref.shape[1]
    cdt = wq_ref.dtype
    hn = _layernorm(x_ref[0].astype(jnp.float32), g1_ref[0], b1_ref[0]).astype(cdt)
    # Per-head 2-D matmuls against resident per-head weight slabs.  The
    # 1/sqrt(head_dim) score scale is already folded into Wq (prepare_params).
    # TODO(synk): a fused (D, 3D) matmul would fill the 256-wide MXU better when
    # head_dim < 256, but needs an in-kernel lane split/transpose of the result;
    # kept per-head for robust lowering since this now runs once per token only.
    for h in range(H):
        q_ref[0, h] = jnp.dot(hn, wq_ref[h],
                              preferred_element_type=jnp.float32).astype(q_ref.dtype)
        k_ref[0, h] = jnp.dot(hn, wk_ref[h],
                              preferred_element_type=jnp.float32).astype(k_ref.dtype)
        v_ref[0, h] = jnp.dot(hn, wv_ref[h],
                              preferred_element_type=jnp.float32).astype(v_ref.dtype)


# ---------------------------------------------------------------------------
# Kernel 2: flash attention (online softmax over key tiles) + head merge +
#           residual + LN2 + FFN + residual.
# ---------------------------------------------------------------------------
def attention_ffn_kernel(xq_ref, q_ref, k_ref, v_ref,
                         wo_ref, bo_ref, g2_ref, b2_ref,
                         w1_ref, bf1_ref, w2_ref, bf2_ref,
                         o_ref,
                         m_scr, l_scr, acc_scr):
    H, tq, hd = acc_scr.shape
    tk = k_ref.shape[2]
    cdt = q_ref.dtype
    approx = bool(jnp.dtype(cdt) != jnp.float32)   # exact reciprocal on the f32 path

    qi = pl.program_id(1)
    ki = pl.program_id(2)
    nk = pl.num_programs(2)

    # ---- first key tile: reset the flash-attention carry ----
    @pl.when(ki == 0)
    def _init():
        m_scr[...] = jnp.full(m_scr.shape, NEG_INF, jnp.float32)
        l_scr[...] = jnp.zeros(l_scr.shape, jnp.float32)
        acc_scr[...] = jnp.zeros(acc_scr.shape, jnp.float32)

    first_row = qi * tq
    last_row = first_row + (tq - 1)
    first_col = ki * tk
    last_col = first_col + (tk - 1)

    def _online_update(masked):
        q = q_ref[0]                      # (H, tq, hd), already scaled by 1/sqrt(hd)
        k = k_ref[0]                      # (H, tk, hd)
        v = v_ref[0]                      # (H, tk, hd)
        s = jnp.einsum("hqe,hke->hqk", q, k,
                       preferred_element_type=jnp.float32)        # (H, tq, tk) f32
        if masked:
            # causal mask built per tile, and only for diagonal-straddling tiles
            rows = first_row + jax.lax.broadcasted_iota(jnp.int32, (tq, tk), 0)
            cols = first_col + jax.lax.broadcasted_iota(jnp.int32, (tq, tk), 1)
            s = jnp.where((rows >= cols)[None], s, NEG_INF)
        m_prev = m_scr[...]
        m_new = jnp.maximum(m_prev, jnp.max(s, axis=-1, keepdims=True))
        alpha = jnp.exp(m_prev - m_new)
        p = jnp.exp(s - m_new)                                    # (H, tq, tk) f32
        l_scr[...] = alpha * l_scr[...] + jnp.sum(p, axis=-1, keepdims=True)
        acc_scr[...] = alpha * acc_scr[...] + jnp.einsum(
            "hqk,hke->hqe", p.astype(cdt), v, preferred_element_type=jnp.float32)
        m_scr[...] = m_new

    # tiles fully at/below the diagonal: no mask work at all
    @pl.when(last_col <= first_row)
    def _below_diag():
        _online_update(masked=False)

    # tiles straddling the diagonal: masked update
    @pl.when(jnp.logical_and(last_col > first_row, first_col <= last_row))
    def _straddle():
        _online_update(masked=True)

    # tiles fully above the diagonal are skipped entirely (their K/V DMA is also
    # avoided by the clamped index_map in the wrapper).

    # ---- last key tile: merge heads, residual, LN2, FFN, residual, store ----
    @pl.when(ki == nk - 1)
    def _finalize():
        x = xq_ref[0].astype(jnp.float32)                         # (tq, D)
        ctx = acc_scr[...] * pl.reciprocal(l_scr[...], approx=approx)   # (H, tq, hd)
        # per-head accumulation into (tq, D): no (H, tq, D) intermediate, no H-way
        # vector reduce; same FLOPs as one K=D matmul.
        attn = jnp.dot(ctx[0].astype(cdt), wo_ref[0],
                       preferred_element_type=jnp.float32)
        for h in range(1, H):
            attn = attn + jnp.dot(ctx[h].astype(cdt), wo_ref[h],
                                  preferred_element_type=jnp.float32)
        # drop_shortcut is identity (drop_rate = 0 / eval)
        x1 = x + attn + bo_ref[0]

        h2 = _layernorm(x1, g2_ref[0], b2_ref[0])
        f = jnp.dot(h2.astype(cdt), w1_ref[...],
                    preferred_element_type=jnp.float32) + bf1_ref[0]    # (tq, 4D)
        f = _gelu(f)
        f = jnp.dot(f.astype(cdt), w2_ref[...],
                    preferred_element_type=jnp.float32) + bf2_ref[0]    # (tq, D)
        o_ref[0] = (x1 + f).astype(o_ref.dtype)


# ---------------------------------------------------------------------------
# Wrapper helpers
# ---------------------------------------------------------------------------
def _pick_tile(total, target):
    for cand in (target, 512, 256, 128, 64, 32, 16, 8):
        if cand <= total and total % cand == 0:
            return cand
    return total  # fall back to the full (untiled) extent


def _vmem_limit(estimate_bytes):
    try:
        cap = int(pltpu.get_tpu_info().vmem_capacity_bytes)
    except Exception:
        cap = 64 * 1024 * 1024          # conservative: assume v7x-sized VMEM
    cap_eff = int(cap * 0.85)           # leave Mosaic internal-scratch headroom
    floor = min(32 * 1024 * 1024, cap_eff)
    return int(min(max(int(estimate_bytes), floor), cap_eff))


def _resident_spec(shape, grid_rank):
    """Constant-index (whole-array) block: DMA'd once, stays resident across the
    grid.  pipeline_mode=pl.Buffered(1) drops its double-buffer copy."""
    if grid_rank == 2:
        idx = lambda b, t: (0,) * len(shape)
    else:
        idx = lambda b, qi, ki: (0,) * len(shape)
    if hasattr(pl, "Buffered"):
        try:
            return pl.BlockSpec(shape, idx, pipeline_mode=pl.Buffered(1))
        except TypeError:
            pass
    return pl.BlockSpec(shape, idx)


def prepare_params(params, num_heads, compute_dtype=None, x_dtype=jnp.float32):
    """One-off weight arrangement (per-head split, cast, 1/sqrt(hd) folding).

    Call this once per model (outside the per-step jit) and pass the result to
    transformer_block(..., prepared=...) so the transpose/cast pass over the
    weights is not re-run on every invocation."""
    D = params["wq"].shape[0]
    H = num_heads
    assert D % H == 0
    hd = D // H
    cdt = jnp.dtype(compute_dtype) if compute_dtype is not None else jnp.dtype(x_dtype)
    scale = 1.0 / math.sqrt(hd)

    def split_in(w):                                   # (D, H*hd) -> (H, D, hd)
        return jnp.transpose(w.reshape(D, H, hd), (1, 0, 2)).astype(cdt)

    f32 = lambda a: a.astype(jnp.float32)
    return {
        "wq_h": split_in(params["wq"] * scale),        # fold 1/sqrt(hd) into Wq
        "wk_h": split_in(params["wk"]),
        "wv_h": split_in(params["wv"]),
        "wo_h": params["wo"].reshape(H, hd, D).astype(cdt),
        "w1": params["w1"].astype(cdt),
        "w2": params["w2"].astype(cdt),
        "bo": f32(params["bo"]), "bf1": f32(params["bf1"]), "bf2": f32(params["bf2"]),
        "g1": f32(params["g1"]), "b1": f32(params["b1"]),
        "g2": f32(params["g2"]), "b2": f32(params["b2"]),
        "compute_dtype": cdt, "num_heads": H, "head_dim": hd,
    }


def transformer_block(x, params=None, num_heads=None, *, prepared=None,
                      compute_dtype=None, q_tile=256, k_tile=256, p_tile=256):
    B, T, D = x.shape
    if prepared is None:
        prepared = prepare_params(params, num_heads, compute_dtype, x.dtype)
    H = prepared["num_heads"]
    hd = prepared["head_dim"]
    cdt = prepared["compute_dtype"]
    H4 = prepared["w1"].shape[1]
    xsz = jnp.dtype(x.dtype).itemsize
    csz = jnp.dtype(cdt).itemsize

    tq = _pick_tile(T, q_tile)
    tk = _pick_tile(T, k_tile)
    tp = _pick_tile(T, p_tile)
    # v7x has 2 TensorCores sharing the grid's parallel axes: make sure there are
    # at least 2 independent (b, qi) work items even at B = 1.
    while B * (T // tq) < 2 and tq >= 16 and T % (tq // 2) == 0:
        tq //= 2
    nq, nk, nt = T // tq, T // tk, T // tp

    # ------------------ kernel 1: LN1 + QKV projection ------------------
    est1 = 2 * tp * D * xsz + tp * D * (4 + csz)      # x tile, LN result + cast
    est1 += 3 * D * D * csz                            # resident Wq/Wk/Wv
    est1 += 6 * tp * D * csz + 3 * tp * hd * 4         # q/k/v out tiles + dot temps
    est1 = int(1.4 * est1)

    qkv_shape = jax.ShapeDtypeStruct((B, H, T, hd), cdt)
    q_all, k_all, v_all = pl.pallas_call(
        qkv_projection_kernel,
        out_shape=(qkv_shape, qkv_shape, qkv_shape),
        grid=(B, nt),
        in_specs=[
            pl.BlockSpec((1, tp, D), lambda b, t: (b, t, 0)),
            _resident_spec((1, D), 2), _resident_spec((1, D), 2),     # LN1 gamma/beta
            _resident_spec((H, D, hd), 2),                            # Wq (per-head)
            _resident_spec((H, D, hd), 2),                            # Wk
            _resident_spec((H, D, hd), 2),                            # Wv
        ],
        out_specs=(
            pl.BlockSpec((1, H, tp, hd), lambda b, t: (b, 0, t, 0)),
            pl.BlockSpec((1, H, tp, hd), lambda b, t: (b, 0, t, 0)),
            pl.BlockSpec((1, H, tp, hd), lambda b, t: (b, 0, t, 0)),
        ),
        compiler_params=pltpu.CompilerParams(
            dimension_semantics=("parallel", "parallel"),
            vmem_limit_bytes=_vmem_limit(est1),
        ),
    )(x, prepared["g1"], prepared["b1"],
      prepared["wq_h"], prepared["wk_h"], prepared["wv_h"])

    # --------- kernel 2: flash attention + merge + LN2 + FFN ---------
    est2 = 4 * tq * D * xsz                                # x tile + out tile
    est2 += 2 * tq * D * csz + 4 * tk * D * csz            # q / k / v tiles
    est2 += (D * D + 2 * D * H4) * csz                     # Wo, W1, W2 (resident)
    est2 += H * tq * (2 * 128 + hd) * 4                    # m / l / acc scratch
    est2 += 3 * H * tq * tk * 4                            # scores / probs / mask temps
    est2 += (H * tq * hd + 3 * tq * D + 2 * tq * H4) * 4   # ctx / x1 / h2 / FFN temps
    est2 = int(1.4 * est2)

    def kv_index(b, qi, ki):
        # clamp so causally-skipped key tiles reuse the resident block (no new DMA)
        last_needed = ((qi + 1) * tq - 1) // tk
        return (b, 0, jnp.minimum(ki, last_needed), 0)

    out = pl.pallas_call(
        attention_ffn_kernel,
        out_shape=jax.ShapeDtypeStruct((B, T, D), x.dtype),
        grid=(B, nq, nk),
        in_specs=[
            pl.BlockSpec((1, tq, D), lambda b, qi, ki: (b, qi, 0)),        # x (residual)
            pl.BlockSpec((1, H, tq, hd), lambda b, qi, ki: (b, 0, qi, 0)),  # Q
            pl.BlockSpec((1, H, tk, hd), kv_index),                        # K
            pl.BlockSpec((1, H, tk, hd), kv_index),                        # V
            _resident_spec((H, hd, D), 3),                                 # Wo (per-head)
            _resident_spec((1, D), 3),                                     # bo
            _resident_spec((1, D), 3), _resident_spec((1, D), 3),          # LN2
            _resident_spec((D, H4), 3), _resident_spec((1, H4), 3),        # FF W1, b1
            _resident_spec((H4, D), 3), _resident_spec((1, D), 3),         # FF W2, b2
        ],
        out_specs=pl.BlockSpec((1, tq, D), lambda b, qi, ki: (b, qi, 0)),
        scratch_shapes=[
            pltpu.VMEM((H, tq, 1), jnp.float32),    # running max
            pltpu.VMEM((H, tq, 1), jnp.float32),    # running denominator
            pltpu.VMEM((H, tq, hd), jnp.float32),   # context accumulator
        ],
        compiler_params=pltpu.CompilerParams(
            dimension_semantics=("parallel", "parallel", "arbitrary"),
            vmem_limit_bytes=_vmem_limit(est2),
        ),
    )(x, q_all, k_all, v_all,
      prepared["wo_h"], prepared["bo"], prepared["g2"], prepared["b2"],
      prepared["w1"], prepared["bf1"], prepared["w2"], prepared["bf2"])
    return out


def transformer_block_reference(x, params, num_heads):
    # Pure-JAX reference (mirrors the PyTorch forward) for numerical validation.
    B, T, D = x.shape
    hd = D // num_heads

    h = _layernorm(x, params["g1"][0], params["b1"][0])
    q = h @ params["wq"]
    k = h @ params["wk"]
    v = h @ params["wv"]
    q = q.reshape(B, T, num_heads, hd).transpose(0, 2, 1, 3)
    k = k.reshape(B, T, num_heads, hd).transpose(0, 2, 1, 3)
    v = v.reshape(B, T, num_heads, hd).transpose(0, 2, 1, 3)
    s = jnp.einsum("bhqd,bhkd->bhqk", q, k) / math.sqrt(hd)
    mask = jnp.tril(jnp.ones((T, T), bool))
    s = jnp.where(mask, s, -jnp.inf)
    p = jax.nn.softmax(s, axis=-1)
    ctx = jnp.einsum("bhqk,bhkd->bhqd", p, v).transpose(0, 2, 1, 3).reshape(B, T, D)
    attn = ctx @ params["wo"] + params["bo"][0]
    x1 = x + attn

    h2 = _layernorm(x1, params["g2"][0], params["b2"][0])
    f = _gelu(h2 @ params["w1"] + params["bf1"][0])
    f = f @ params["w2"] + params["bf2"][0]
    return x1 + f


if __name__ == "__main__":
    cfg = dict(emb_dim=32, context_length=16, n_heads=4, drop_rate=0.0, qkv_bias=False)
    B, T, D = 2, cfg["context_length"], cfg["emb_dim"]
    H4 = 4 * D

    key = jax.random.PRNGKey(0)
    ks = jax.random.split(key, 12)
    s = 0.02
    params = {
        "wq": jax.random.normal(ks[0], (D, D), jnp.float32) * s,
        "wk": jax.random.normal(ks[1], (D, D), jnp.float32) * s,
        "wv": jax.random.normal(ks[2], (D, D), jnp.float32) * s,
        "wo": jax.random.normal(ks[3], (D, D), jnp.float32) * s,
        "bo": jnp.zeros((1, D), jnp.float32),
        "g1": 1.0 + 0.1 * jax.random.normal(ks[4], (1, D), jnp.float32),
        "b1": 0.1 * jax.random.normal(ks[5], (1, D), jnp.float32),
        "g2": 1.0 + 0.1 * jax.random.normal(ks[6], (1, D), jnp.float32),
        "b2": 0.1 * jax.random.normal(ks[7], (1, D), jnp.float32),
        "w1": jax.random.normal(ks[8], (D, H4), jnp.float32) * s,
        "bf1": 0.01 * jax.random.normal(ks[9], (1, H4), jnp.float32),
        "w2": jax.random.normal(ks[10], (H4, D), jnp.float32) * s,
        "bf2": jnp.zeros((1, D), jnp.float32),
    }
    x = jax.random.normal(ks[11], (B, T, D), jnp.float32)

    ref = transformer_block_reference(x, params, cfg["n_heads"])

    # f32 path: tiny tiles so the multi-tile flash path is exercised (2 q-tiles x
    # 2 k-tiles: one masked diagonal tile, one unmasked below-diagonal tile, and
    # one causally-skipped tile whose DMA is clamped away).
    prep_f32 = prepare_params(params, cfg["n_heads"], compute_dtype=jnp.float32)
    out = transformer_block(x, prepared=prep_f32, q_tile=8, k_tile=8, p_tile=8)
    out = jax.block_until_ready(out)
    assert out.shape == (B, T, D) and out.dtype == x.dtype
    assert jnp.allclose(out, ref, atol=2e-4, rtol=2e-4), "f32 kernel mismatch vs reference"

    # bf16 MXU-operand path (LayerNorm / softmax stats / residuals stay f32).
    prep_bf16 = prepare_params(params, cfg["n_heads"], compute_dtype=jnp.bfloat16)
    out_bf16 = transformer_block(x, prepared=prep_bf16, q_tile=8, k_tile=8, p_tile=8)
    out_bf16 = jax.block_until_ready(out_bf16)
    assert jnp.allclose(out_bf16, ref, atol=5e-2, rtol=5e-2), "bf16 kernel mismatch vs reference"

    print("KERNEL_OK")
</pallas_src>

<mosaic_0001>
module attributes {stable_mosaic.version = 11 : i64} {
  func.func @qkv_projection_kernel(%arg0: i32, %arg1: i32, %arg2: memref<1x8x32xf32, #tpu.memory_space<vmem>>, %arg3: memref<1x32xf32, #tpu.memory_space<vmem>>, %arg4: memref<1x32xf32, #tpu.memory_space<vmem>>, %arg5: memref<4x32x8xf32, #tpu.memory_space<vmem>>, %arg6: memref<4x32x8xf32, #tpu.memory_space<vmem>>, %arg7: memref<4x32x8xf32, #tpu.memory_space<vmem>>, %arg8: memref<1x4x8x8xf32, #tpu.memory_space<vmem>>, %arg9: memref<1x4x8x8xf32, #tpu.memory_space<vmem>>, %arg10: memref<1x4x8x8xf32, #tpu.memory_space<vmem>>) attributes {dimension_semantics = [#tpu.dimension_semantics<parallel>, #tpu.dimension_semantics<parallel>], iteration_bounds = array<i64: 2, 2>, scalar_prefetch = 0 : i64, scratch_operands = 0 : i64, tpu.core_type = #tpu.core_type<tc>, window_params = [{transform_indices = @transform_0, window_bounds = array<i64: 1, 8, 32>}, {pipeline_mode = #tpu.pipeline_mode<synchronous>, transform_indices = @transform_1, window_bounds = array<i64: 1, 32>}, {pipeline_mode = #tpu.pipeline_mode<synchronous>, transform_indices = @transform_2, window_bounds = array<i64: 1, 32>}, {pipeline_mode = #tpu.pipeline_mode<synchronous>, transform_indices = @transform_3, window_bounds = array<i64: 4, 32, 8>}, {pipeline_mode = #tpu.pipeline_mode<synchronous>, transform_indices = @transform_4, window_bounds = array<i64: 4, 32, 8>}, {pipeline_mode = #tpu.pipeline_mode<synchronous>, transform_indices = @transform_5, window_bounds = array<i64: 4, 32, 8>}, {transform_indices = @transform_6, window_bounds = array<i64: 1, 4, 8, 8>}, {transform_indices = @transform_7, window_bounds = array<i64: 1, 4, 8, 8>}, {transform_indices = @transform_8, window_bounds = array<i64: 1, 4, 8, 8>}]} {
    %c0 = arith.constant 0 : index
    %c0_0 = arith.constant 0 : index
    %c0_1 = arith.constant 0 : index
    %0 = vector.load %arg2[%c0, %c0_0, %c0_1] : memref<1x8x32xf32, #tpu.memory_space<vmem>>, vector<1x8x32xf32>
    %1 = vector.shape_cast %0 : vector<1x8x32xf32> to vector<8x32xf32>
    %c0_2 = arith.constant 0 : index
    %c0_3 = arith.constant 0 : index
    %2 = vector.load %arg3[%c0_2, %c0_3] : memref<1x32xf32, #tpu.memory_space<vmem>>, vector<1x32xf32>
    %3 = vector.shape_cast %2 : vector<1x32xf32> to vector<32xf32>
    %c0_4 = arith.constant 0 : index
    %c0_5 = arith.constant 0 : index
    %4 = vector.load %arg4[%c0_4, %c0_5] : memref<1x32xf32, #tpu.memory_space<vmem>>, vector<1x32xf32>
    %5 = vector.shape_cast %4 : vector<1x32xf32> to vector<32xf32>
    %cst = arith.constant dense<0.000000e+00> : vector<8xf32>
    %6 = vector.multi_reduction <add>, %1, %cst [1] : vector<8x32xf32> to vector<8xf32>
    %7 = vector.shape_cast %6 : vector<8xf32> to vector<8x1xf32>
    %cst_6 = arith.constant 3.200000e+01 : f32
    %8 = vector.broadcast %cst_6 : f32 to vector<8x1xf32>
    %9 = arith.divf %7, %8 : vector<8x1xf32>
    %10 = vector.broadcast %9 : vector<8x1xf32> to vector<8x32xf32>
    %11 = arith.subf %1, %10 : vector<8x32xf32>
    %12 = arith.mulf %11, %11 : vector<8x32xf32>
    %cst_7 = arith.constant dense<0.000000e+00> : vector<8xf32>
    %13 = vector.multi_reduction <add>, %12, %cst_7 [1] : vector<8x32xf32> to vector<8xf32>
    %14 = vector.shape_cast %13 : vector<8xf32> to vector<8x1xf32>
    %cst_8 = arith.constant 3.200000e+01 : f32
    %15 = vector.broadcast %cst_8 : f32 to vector<8x1xf32>
    %16 = arith.divf %14, %15 : vector<8x1xf32>
    %17 = vector.broadcast %9 : vector<8x1xf32> to vector<8x32xf32>
    %18 = arith.subf %1, %17 : vector<8x32xf32>
    %cst_9 = arith.constant 9.99999974E-6 : f32
    %19 = vector.broadcast %cst_9 : f32 to vector<8x1xf32>
    %20 = arith.addf %16, %19 : vector<8x1xf32>
    %21 = math.rsqrt %20 : vector<8x1xf32>
    %22 = vector.broadcast %21 : vector<8x1xf32> to vector<8x32xf32>
    %23 = arith.mulf %18, %22 : vector<8x32xf32>
    %24 = vector.shape_cast %3 : vector<32xf32> to vector<1x32xf32>
    %25 = vector.broadcast %24 : vector<1x32xf32> to vector<8x32xf32>
    %26 = arith.mulf %23, %25 : vector<8x32xf32>
    %27 = vector.shape_cast %5 : vector<32xf32> to vector<1x32xf32>
    %28 = vector.broadcast %27 : vector<1x32xf32> to vector<8x32xf32>
    %29 = arith.addf %26, %28 : vector<8x32xf32>
    %c0_10 = arith.constant 0 : index
    %c0_11 = arith.constant 0 : index
    %c0_12 = arith.constant 0 : index
    %30 = vector.load %arg5[%c0_10, %c0_11, %c0_12] : memref<4x32x8xf32, #tpu.memory_space<vmem>>, vector<1x32x8xf32>
    %31 = vector.shape_cast %30 : vector<1x32x8xf32> to vector<32x8xf32>
    %cst_13 = arith.constant dense<0.000000e+00> : vector<8x8xf32>
    %32 = tpu.matmul %29, %31, %cst_13 {dimension_numbers = #tpu.dot_dimension_numbers<[1], [0], [0], [1], [0, 0, 1, 1], [], []>} : vector<8x32xf32>, vector<32x8xf32>, vector<8x8xf32> -> vector<8x8xf32>
    %c0_14 = arith.constant 0 : index
    %c0_15 = arith.constant 0 : index
    %c0_16 = arith.constant 0 : index
    %c0_17 = arith.constant 0 : index
    %33 = vector.load %arg8[%c0_14, %c0_15, %c0_16, %c0_17] : memref<1x4x8x8xf32, #tpu.memory_space<vmem>>, vector<1x1x8x8xf32>
    %34 = vector.shape_cast %33 : vector<1x1x8x8xf32> to vector<8x8xf32>
    %35 = vector.shape_cast %32 : vector<8x8xf32> to vector<1x1x8x8xf32>
    tpu.vector_store %arg8[%c0_14, %c0_15, %c0_16, %c0_17], %35 {strides = array<i32>} : memref<1x4x8x8xf32, #tpu.memory_space<vmem>>, vector<1x1x8x8xf32>,
    %c0_18 = arith.constant 0 : index
    %c0_19 = arith.constant 0 : index
    %c0_20 = arith.constant 0 : index
    %36 = vector.load %arg6[%c0_18, %c0_19, %c0_20] : memref<4x32x8xf32, #tpu.memory_space<vmem>>, vector<1x32x8xf32>
    %37 = vector.shape_cast %36 : vector<1x32x8xf32> to vector<32x8xf32>
    %cst_21 = arith.constant dense<0.000000e+00> : vector<8x8xf32>
    %38 = tpu.matmul %29, %37, %cst_21 {dimension_numbers = #tpu.dot_dimension_numbers<[1], [0], [0], [1], [0, 0, 1, 1], [], []>} : vector<8x32xf32>, vector<32x8xf32>, vector<8x8xf32> -> vector<8x8xf32>
    %c0_22 = arith.constant 0 : index
    %c0_23 = arith.constant 0 : index
    %c0_24 = arith.constant 0 : index
    %c0_25 = arith.constant 0 : index
    %39 = vector.load %arg9[%c0_22, %c0_23, %c0_24, %c0_25] : memref<1x4x8x8xf32, #tpu.memory_space<vmem>>, vector<1x1x8x8xf32>
    %40 = vector.shape_cast %39 : vector<1x1x8x8xf32> to vector<8x8xf32>
    %41 = vector.shape_cast %38 : vector<8x8xf32> to vector<1x1x8x8xf32>
    tpu.vector_store %arg9[%c0_22, %c0_23, %c0_24, %c0_25], %41 {strides = array<i32>} : memref<1x4x8x8xf32, #tpu.memory_space<vmem>>, vector<1x1x8x8xf32>,
    %c0_26 = arith.constant 0 : index
    %c0_27 = arith.constant 0 : index
    %c0_28 = arith.constant 0 : index
    %42 = vector.load %arg7[%c0_26, %c0_27, %c0_28] : memref<4x32x8xf32, #tpu.memory_space<vmem>>, vector<1x32x8xf32>
    %43 = vector.shape_cast %42 : vector<1x32x8xf32> to vector<32x8xf32>
    %cst_29 = arith.constant dense<0.000000e+00> : vector<8x8xf32>
    %44 = tpu.matmul %29, %43, %cst_29 {dimension_numbers = #tpu.dot_dimension_numbers<[1], [0], [0], [1], [0, 0, 1, 1], [], []>} : vector<8x32xf32>, vector<32x8xf32>, vector<8x8xf32> -> vector<8x8xf32>
    %c0_30 = arith.constant 0 : index
    %c0_31 = arith.constant 0 : index
    %c0_32 = arith.constant 0 : index
    %c0_33 = arith.constant 0 : index
    %45 = vector.load %arg10[%c0_30, %c0_31, %c0_32, %c0_33] : memref<1x4x8x8xf32, #tpu.memory_space<vmem>>, vector<1x1x8x8xf32>
    %46 = vector.shape_cast %45 : vector<1x1x8x8xf32> to vector<8x8xf32>
    %47 = vector.shape_cast %44 : vector<8x8xf32> to vector<1x1x8x8xf32>
    tpu.vector_store %arg10[%c0_30, %c0_31, %c0_32, %c0_33], %47 {strides = array<i32>} : memref<1x4x8x8xf32, #tpu.memory_space<vmem>>, vector<1x1x8x8xf32>,
    %c1 = arith.constant 1 : index
    %c0_34 = arith.constant 0 : index
    %c0_35 = arith.constant 0 : index
    %48 = vector.load %arg5[%c1, %c0_34, %c0_35] : memref<4x32x8xf32, #tpu.memory_space<vmem>>, vector<1x32x8xf32>
    %49 = vector.shape_cast %48 : vector<1x32x8xf32> to vector<32x8xf32>
    %cst_36 = arith.constant dense<0.000000e+00> : vector<8x8xf32>
    %50 = tpu.matmul %29, %49, %cst_36 {dimension_numbers = #tpu.dot_dimension_numbers<[1], [0], [0], [1], [0, 0, 1, 1], [], []>} : vector<8x32xf32>, vector<32x8xf32>, vector<8x8xf32> -> vector<8x8xf32>
    %c0_37 = arith.constant 0 : index
    %c1_38 = arith.constant 1 : index
    %c0_39 = arith.constant 0 : index
    %c0_40 = arith.constant 0 : index
    %51 = vector.load %arg8[%c0_37, %c1_38, %c0_39, %c0_40] : memref<1x4x8x8xf32, #tpu.memory_space<vmem>>, vector<1x1x8x8xf32>
    %52 = vector.shape_cast %51 : vector<1x1x8x8xf32> to vector<8x8xf32>
    %53 = vector.shape_cast %50 : vector<8x8xf32> to vector<1x1x8x8xf32>
    tpu.vector_store %arg8[%c0_37, %c1_38, %c0_39, %c0_40], %53 {strides = array<i32>} : memref<1x4x8x8xf32, #tpu.memory_space<vmem>>, vector<1x1x8x8xf32>,
    %c1_41 = arith.constant 1 : index
    %c0_42 = arith.constant 0 : index
    %c0_43 = arith.constant 0 : index
    %54 = vector.load %arg6[%c1_41, %c0_42, %c0_43] : memref<4x32x8xf32, #tpu.memory_space<vmem>>, vector<1x32x8xf32>
    %55 = vector.shape_cast %54 : vector<1x32x8xf32> to vector<32x8xf32>
    %cst_44 = arith.constant dense<0.000000e+00> : vector<8x8xf32>
    %56 = tpu.matmul %29, %55, %cst_44 {dimension_numbers = #tpu.dot_dimension_numbers<[1], [0], [0], [1], [0, 0, 1, 1], [], []>} : vector<8x32xf32>, vector<32x8xf32>, vector<8x8xf32> -> vector<8x8xf32>
    %c0_45 = arith.constant 0 : index
    %c1_46 = arith.constant 1 : index
    %c0_47 = arith.constant 0 : index
    %c0_48 = arith.constant 0 : index
    %57 = vector.load %arg9[%c0_45, %c1_46, %c0_47, %c0_48] : memref<1x4x8x8xf32, #tpu.memory_space<vmem>>, vector<1x1x8x8xf32>
    %58 = vector.shape_cast %57 : vector<1x1x8x8xf32> to vector<8x8xf32>
    %59 = vector.shape_cast %56 : vector<8x8xf32> to vector<1x1x8x8xf32>
    tpu.vector_store %arg9[%c0_45, %c1_46, %c0_47, %c0_48], %59 {strides = array<i32>} : memref<1x4x8x8xf32, #tpu.memory_space<vmem>>, vector<1x1x8x8xf32>,
    %c1_49 = arith.constant 1 : index
    %c0_50 = arith.constant 0 : index
    %c0_51 = arith.constant 0 : index
    %60 = vector.load %arg7[%c1_49, %c0_50, %c0_51] : memref<4x32x8xf32, #tpu.memory_space<vmem>>, vector<1x32x8xf32>
    %61 = vector.shape_cast %60 : vector<1x32x8xf32> to vector<32x8xf32>
    %cst_52 = arith.constant dense<0.000000e+00> : vector<8x8xf32>
    %62 = tpu.matmul %29, %61, %cst_52 {dimension_numbers = #tpu.dot_dimension_numbers<[1], [0], [0], [1], [0, 0, 1, 1], [], []>} : vector<8x32xf32>, vector<32x8xf32>, vector<8x8xf32> -> vector<8x8xf32>
    %c0_53 = arith.constant 0 : index
    %c1_54 = arith.constant 1 : index
    %c0_55 = arith.constant 0 : index
    %c0_56 = arith.constant 0 : index
    %63 = vector.load %arg10[%c0_53, %c1_54, %c0_55, %c0_56] : memref<1x4x8x8xf32, #tpu.memory_space<vmem>>, vector<1x1x8x8xf32>
    %64 = vector.shape_cast %63 : vector<1x1x8x8xf32> to vector<8x8xf32>
    %65 = vector.shape_cast %62 : vector<8x8xf32> to vector<1x1x8x8xf32>
    tpu.vector_store %arg10[%c0_53, %c1_54, %c0_55, %c0_56], %65 {strides = array<i32>} : memref<1x4x8x8xf32, #tpu.memory_space<vmem>>, vector<1x1x8x8xf32>,
    %c2 = arith.constant 2 : index
    %c0_57 = arith.constant 0 : index
    %c0_58 = arith.constant 0 : index
    %66 = vector.load %arg5[%c2, %c0_57, %c0_58] : memref<4x32x8xf32, #tpu.memory_space<vmem>>, vector<1x32x8xf32>
    %67 = vector.shape_cast %66 : vector<1x32x8xf32> to vector<32x8xf32>
    %cst_59 = arith.constant dense<0.000000e+00> : vector<8x8xf32>
    %68 = tpu.matmul %29, %67, %cst_59 {dimension_numbers = #tpu.dot_dimension_numbers<[1], [0], [0], [1], [0, 0, 1, 1], [], []>} : vector<8x32xf32>, vector<32x8xf32>, vector<8x8xf32> -> vector<8x8xf32>
    %c0_60 = arith.constant 0 : index
    %c2_61 = arith.constant 2 : index
    %c0_62 = arith.constant 0 : index
    %c0_63 = arith.constant 0 : index
    %69 = vector.load %arg8[%c0_60, %c2_61, %c0_62, %c0_63] : memref<1x4x8x8xf32, #tpu.memory_space<vmem>>, vector<1x1x8x8xf32>
    %70 = vector.shape_cast %69 : vector<1x1x8x8xf32> to vector<8x8xf32>
    %71 = vector.shape_cast %68 : vector<8x8xf32> to vector<1x1x8x8xf32>
    tpu.vector_store %arg8[%c0_60, %c2_61, %c0_62, %c0_63], %71 {strides = array<i32>} : memref<1x4x8x8xf32, #tpu.memory_space<vmem>>, vector<1x1x8x8xf32>,
    %c2_64 = arith.constant 2 : index
    %c0_65 = arith.constant 0 : index
    %c0_66 = arith.constant 0 : index
    %72 = vector.load %arg6[%c2_64, %c0_65, %c0_66] : memref<4x32x8xf32, #tpu.memory_space<vmem>>, vector<1x32x8xf32>
    %73 = vector.shape_cast %72 : vector<1x32x8xf32> to vector<32x8xf32>
    %cst_67 = arith.constant dense<0.000000e+00> : vector<8x8xf32>
    %74 = tpu.matmul %29, %73, %cst_67 {dimension_numbers = #tpu.dot_dimension_numbers<[1], [0], [0], [1], [0, 0, 1, 1], [], []>} : vector<8x32xf32>, vector<32x8xf32>, vector<8x8xf32> -> vector<8x8xf32>
    %c0_68 = arith.constant 0 : index
    %c2_69 = arith.constant 2 : index
    %c0_70 = arith.constant 0 : index
    %c0_71 = arith.constant 0 : index
    %75 = vector.load %arg9[%c0_68, %c2_69, %c0_70, %c0_71] : memref<1x4x8x8xf32, #tpu.memory_space<vmem>>, vector<1x1x8x8xf32>
    %76 = vector.shape_cast %75 : vector<1x1x8x8xf32> to vector<8x8xf32>
    %77 = vector.shape_cast %74 : vector<8x8xf32> to vector<1x1x8x8xf32>
    tpu.vector_store %arg9[%c0_68, %c2_69, %c0_70, %c0_71], %77 {strides = array<i32>} : memref<1x4x8x8xf32, #tpu.memory_space<vmem>>, vector<1x1x8x8xf32>,
    %c2_72 = arith.constant 2 : index
    %c0_73 = arith.constant 0 : index
    %c0_74 = arith.constant 0 : index
    %78 = vector.load %arg7[%c2_72, %c0_73, %c0_74] : memref<4x32x8xf32, #tpu.memory_space<vmem>>, vector<1x32x8xf32>
    %79 = vector.shape_cast %78 : vector<1x32x8xf32> to vector<32x8xf32>
    %cst_75 = arith.constant dense<0.000000e+00> : vector<8x8xf32>
    %80 = tpu.matmul %29, %79, %cst_75 {dimension_numbers = #tpu.dot_dimension_numbers<[1], [0], [0], [1], [0, 0, 1, 1], [], []>} : vector<8x32xf32>, vector<32x8xf32>, vector<8x8xf32> -> vector<8x8xf32>
    %c0_76 = arith.constant 0 : index
    %c2_77 = arith.constant 2 : index
    %c0_78 = arith.constant 0 : index
    %c0_79 = arith.constant 0 : index
    %81 = vector.load %arg10[%c0_76, %c2_77, %c0_78, %c0_79] : memref<1x4x8x8xf32, #tpu.memory_space<vmem>>, vector<1x1x8x8xf32>
    %82 = vector.shape_cast %81 : vector<1x1x8x8xf32> to vector<8x8xf32>
    %83 = vector.shape_cast %80 : vector<8x8xf32> to vector<1x1x8x8xf32>
    tpu.vector_store %arg10[%c0_76, %c2_77, %c0_78, %c0_79], %83 {strides = array<i32>} : memref<1x4x8x8xf32, #tpu.memory_space<vmem>>, vector<1x1x8x8xf32>,
    %c3 = arith.constant 3 : index
    %c0_80 = arith.constant 0 : index
    %c0_81 = arith.constant 0 : index
    %84 = vector.load %arg5[%c3, %c0_80, %c0_81] : memref<4x32x8xf32, #tpu.memory_space<vmem>>, vector<1x32x8xf32>
    %85 = vector.shape_cast %84 : vector<1x32x8xf32> to vector<32x8xf32>
    %cst_82 = arith.constant dense<0.000000e+00> : vector<8x8xf32>
    %86 = tpu.matmul %29, %85, %cst_82 {dimension_numbers = #tpu.dot_dimension_numbers<[1], [0], [0], [1], [0, 0, 1, 1], [], []>} : vector<8x32xf32>, vector<32x8xf32>, vector<8x8xf32> -> vector<8x8xf32>
    %c0_83 = arith.constant 0 : index
    %c3_84 = arith.constant 3 : index
    %c0_85 = arith.constant 0 : index
    %c0_86 = arith.constant 0 : index
    %87 = vector.load %arg8[%c0_83, %c3_84, %c0_85, %c0_86] : memref<1x4x8x8xf32, #tpu.memory_space<vmem>>, vector<1x1x8x8xf32>
    %88 = vector.shape_cast %87 : vector<1x1x8x8xf32> to vector<8x8xf32>
    %89 = vector.shape_cast %86 : vector<8x8xf32> to vector<1x1x8x8xf32>
    tpu.vector_store %arg8[%c0_83, %c3_84, %c0_85, %c0_86], %89 {strides = array<i32>} : memref<1x4x8x8xf32, #tpu.memory_space<vmem>>, vector<1x1x8x8xf32>,
    %c3_87 = arith.constant 3 : index
    %c0_88 = arith.constant 0 : index
    %c0_89 = arith.constant 0 : index
    %90 = vector.load %arg6[%c3_87, %c0_88, %c0_89] : memref<4x32x8xf32, #tpu.memory_space<vmem>>, vector<1x32x8xf32>
    %91 = vector.shape_cast %90 : vector<1x32x8xf32> to vector<32x8xf32>
    %cst_90 = arith.constant dense<0.000000e+00> : vector<8x8xf32>
    %92 = tpu.matmul %29, %91, %cst_90 {dimension_numbers = #tpu.dot_dimension_numbers<[1], [0], [0], [1], [0, 0, 1, 1], [], []>} : vector<8x32xf32>, vector<32x8xf32>, vector<8x8xf32> -> vector<8x8xf32>
    %c0_91 = arith.constant 0 : index
    %c3_92 = arith.constant 3 : index
    %c0_93 = arith.constant 0 : index
    %c0_94 = arith.constant 0 : index
    %93 = vector.load %arg9[%c0_91, %c3_92, %c0_93, %c0_94] : memref<1x4x8x8xf32, #tpu.memory_space<vmem>>, vector<1x1x8x8xf32>
    %94 = vector.shape_cast %93 : vector<1x1x8x8xf32> to vector<8x8xf32>
    %95 = vector.shape_cast %92 : vector<8x8xf32> to vector<1x1x8x8xf32>
    tpu.vector_store %arg9[%c0_91, %c3_92, %c0_93, %c0_94], %95 {strides = array<i32>} : memref<1x4x8x8xf32, #tpu.memory_space<vmem>>, vector<1x1x8x8xf32>,
    %c3_95 = arith.constant 3 : index
    %c0_96 = arith.constant 0 : index
    %c0_97 = arith.constant 0 : index
    %96 = vector.load %arg7[%c3_95, %c0_96, %c0_97] : memref<4x32x8xf32, #tpu.memory_space<vmem>>, vector<1x32x8xf32>
    %97 = vector.shape_cast %96 : vector<1x32x8xf32> to vector<32x8xf32>
    %cst_98 = arith.constant dense<0.000000e+00> : vector<8x8xf32>
    %98 = tpu.matmul %29, %97, %cst_98 {dimension_numbers = #tpu.dot_dimension_numbers<[1], [0], [0], [1], [0, 0, 1, 1], [], []>} : vector<8x32xf32>, vector<32x8xf32>, vector<8x8xf32> -> vector<8x8xf32>
    %c0_99 = arith.constant 0 : index
    %c3_100 = arith.constant 3 : index
    %c0_101 = arith.constant 0 : index
    %c0_102 = arith.constant 0 : index
    %99 = vector.load %arg10[%c0_99, %c3_100, %c0_101, %c0_102] : memref<1x4x8x8xf32, #tpu.memory_space<vmem>>, vector<1x1x8x8xf32>
    %100 = vector.shape_cast %99 : vector<1x1x8x8xf32> to vector<8x8xf32>
    %101 = vector.shape_cast %98 : vector<8x8xf32> to vector<1x1x8x8xf32>
    tpu.vector_store %arg10[%c0_99, %c3_100, %c0_101, %c0_102], %101 {strides = array<i32>} : memref<1x4x8x8xf32, #tpu.memory_space<vmem>>, vector<1x1x8x8xf32>,
    return
  }
  func.func @transform_0(%arg0: i32, %arg1: i32) -> (i32, i32, i32) {
    %c0_i32 = arith.constant 0 : i32
    %c0_i32_0 = arith.constant 0 : i32
    return %arg0, %arg1, %c0_i32 : i32, i32, i32
  }
  func.func @transform_1(%arg0: i32, %arg1: i32) -> (i32, i32) {
    %c0_i32 = arith.constant 0 : i32
    %c0_i32_0 = arith.constant 0 : i32
    %c0_i32_1 = arith.constant 0 : i32
    return %c0_i32, %c0_i32_0 : i32, i32
  }
  func.func @transform_2(%arg0: i32, %arg1: i32) -> (i32, i32) {
    %c0_i32 = arith.constant 0 : i32
    %c0_i32_0 = arith.constant 0 : i32
    %c0_i32_1 = arith.constant 0 : i32
    return %c0_i32, %c0_i32_0 : i32, i32
  }
  func.func @transform_3(%arg0: i32, %arg1: i32) -> (i32, i32, i32) {
    %c0_i32 = arith.constant 0 : i32
    %c0_i32_0 = arith.constant 0 : i32
    %c0_i32_1 = arith.constant 0 : i32
    %c0_i32_2 = arith.constant 0 : i32
    return %c0_i32, %c0_i32_0, %c0_i32_1 : i32, i32, i32
  }
  func.func @transform_4(%arg0: i32, %arg1: i32) -> (i32, i32, i32) {
    %c0_i32 = arith.constant 0 : i32
    %c0_i32_0 = arith.constant 0 : i32
    %c0_i32_1 = arith.constant 0 : i32
    %c0_i32_2 = arith.constant 0 : i32
    return %c0_i32, %c0_i32_0, %c0_i32_1 : i32, i32, i32
  }
  func.func @transform_5(%arg0: i32, %arg1: i32) -> (i32, i32, i32) {
    %c0_i32 = arith.constant 0 : i32
    %c0_i32_0 = arith.constant 0 : i32
    %c0_i32_1 = arith.constant 0 : i32
    %c0_i32_2 = arith.constant 0 : i32
    return %c0_i32, %c0_i32_0, %c0_i32_1 : i32, i32, i32
  }
  func.func @transform_6(%arg0: i32, %arg1: i32) -> (i32, i32, i32, i32) {
    %c0_i32 = arith.constant 0 : i32
    %c0_i32_0 = arith.constant 0 : i32
    %c0_i32_1 = arith.constant 0 : i32
    return %arg0, %c0_i32, %arg1, %c0_i32_0 : i32, i32, i32, i32
  }
  func.func @transform_7(%arg0: i32, %arg1: i32) -> (i32, i32, i32, i32) {
    %c0_i32 = arith.constant 0 : i32
    %c0_i32_0 = arith.constant 0 : i32
    %c0_i32_1 = arith.constant 0 : i32
    return %arg0, %c0_i32, %arg1, %c0_i32_0 : i32, i32, i32, i32
  }
  func.func @transform_8(%arg0: i32, %arg1: i32) -> (i32, i32, i32, i32) {
    %c0_i32 = arith.constant 0 : i32
    %c0_i32_0 = arith.constant 0 : i32
    %c0_i32_1 = arith.constant 0 : i32
    return %arg0, %c0_i32, %arg1, %c0_i32_0 : i32, i32, i32, i32
  }
}

</mosaic_0001>

<llo_original>
// kernel: tpu_custom_call.1
$region0: #{tpu_custom_call.1}
  #allocation0 [shape = 'u32[]', space=smem, size = 0x4, offset = 0x4, fixed_abs, tag = 'smem constant byte address 0x4 - core index']
  #allocation1 [shape = 'u32[144,128]{1,0:T(1,128)}', space=vmem, size = 0x12000, scoped, tag = 'internal scratch']
  %s0 = inlined_call_operand.vmem [shape: f32[2,16,32], index: 0, kind: input, shape index: {}]
  %s1 = inlined_call_operand.vmem [shape: f32[1,32], index: 1, kind: input, shape index: {}]
  %s2 = inlined_call_operand.vmem [shape: f32[1,32], index: 2, kind: input, shape index: {}]
  %s3 = inlined_call_operand.vmem [shape: f32[4,32,8], index: 3, kind: input, shape index: {}]
  %s4 = inlined_call_operand.vmem [shape: f32[4,32,8], index: 4, kind: input, shape index: {}]
  %s5 = inlined_call_operand.vmem [shape: f32[4,32,8], index: 5, kind: input, shape index: {}]
  %s6 = inlined_call_operand.vmem [shape: f32[2,4,16,8], index: 6, kind: output, shape index: {0}]
  %s7 = inlined_call_operand.vmem [shape: f32[2,4,16,8], index: 7, kind: output, shape index: {1}]
  %s8 = inlined_call_operand.vmem [shape: f32[2,4,16,8], index: 8, kind: output, shape index: {2}]
  %9 = xla_tuple %s6, %s7, %s8
  %s10 = sld [smem:[#allocation0]]
  $region175: #{tpu_custom_call.1} parent=0
    _
  %s12 = ssub.s32 1, %s10
  %s13 = scalar_select 0, %s12, %s10
  $region1: #{tpu_custom_call.1} parent=0
    #allocation2 [shape = 'u8[32768]{0}', space=vmem, size = 0x8000, scoped, tag = 'output window, operand 0']
    #allocation3 [shape = 'u8[32768]{0}', space=vmem, size = 0x8000, scoped, tag = 'output window, operand 1']
    #allocation4 [shape = 'u8[32768]{0}', space=vmem, size = 0x8000, scoped, tag = 'output window, operand 2']
    loop: start=0, step=1, limit=6
    $region2: #{tpu_custom_call.1} parent=1 // loop_pre_header
      _
    $region3: #{tpu_custom_call.1} parent=1 // loop_header
      %s15 = sphi 0, %s19
      %p16 = scmp.ge.s32.totalorder %s15, 6
      %s22 = sphi 0, %s34
      %s23 = sphi 0, %s30
      %s24 = sphi 0, %s22
      %s25 = sphi 0, %s23
      %s26 = sphi 0, %s24
      %s27 = sphi 0, %s25
      %s39 = sphi 0, %s41
      %s42 = sphi 0, %s39
      %s43 = sphi 0, %s42
      %s59 = sphi 0, %s43
      %s63 = sphi 0, %s63
      %s65 = sphi 0, %s63
      %s66 = sphi 0, %s65
      %s80 = sphi 0, %s66
      %s84 = sphi 0, %s84
      %s86 = sphi 0, %s84
      %s87 = sphi 0, %s86
      %s101 = sphi 0, %s87
      %s105 = sphi 0, %s105
      %s107 = sphi 0, %s105
      %s108 = sphi 0, %s107
      %s122 = sphi 0, %s108
      %s126 = sphi 0, %s126
      %s128 = sphi 0, %s126
      %s129 = sphi 0, %s128
      %s143 = sphi 0, %s129
      %s147 = sphi 0, %s147
      %s149 = sphi 0, %s147
      %s150 = sphi 0, %s149
      %s164 = sphi 0, %s150
      %s172 = sphi 0, %s174
      %s175 = sphi 0, %s172
      %s176 = sphi 0, %s175
      %s192 = sphi 0, %s176
      %s200 = sphi 0, %s202
      %s203 = sphi 0, %s200
      %s204 = sphi 0, %s203
      %s220 = sphi 0, %s204
      %s228 = sphi 0, %s230
      %s231 = sphi 0, %s228
      %s232 = sphi 0, %s231
      %s248 = sphi 0, %s232
    $region4: #{tpu_custom_call.1} parent=1 // loop_header_branch
      %18 = sbr.rel (%p16) target = $region8
    $region5: #{tpu_custom_call.1} parent=1 // loop_body
      %s20 = ssub.s32 %s15, 1
      %s21 = ssub.s32 %s15, 2
      %s28 = sadd.s32 1, %s23
      %p29 = scmp.ge.s32.totalorder %s28, 2
      %s30 = scalar_select %p29, 0, %s28
      %s31 = sadd.s32 1, %s22
      %s32 = scalar_select %p29, %s31, %s22
      %p33 = scmp.ge.s32.totalorder %s32, 2
      %s34 = scalar_select %p33, 0, %s32
      %s35 = ssub.s32 %s22, %s34
      %s36 = ssub.s32 %s23, %s30
      %s37 = sor.u32 %s35, %s36
      %p38 = scmp.eq.s32.totalorder %s37, 0
      %s40 = sadd.s32 %s39, 1
      %s41 = scalar_select %p38, %s39, %s40
      %p44 = pneg %p38
      %p45 = scmp.eq.s32.totalorder %s15, 3
      %p46 = por %p44, %p45
      %p47 = scmp.ne.s32.totalorder %s39, %s42
      %p48 = scmp.eq.s32.totalorder %s15, 0
      %p49 = por %p47, %p48
      %p50 = scmp.ne.s32.totalorder %s39, %s42
      %p51 = scmp.eq.s32.totalorder %s20, 3
      %p52 = por %p50, %p51
      %p53 = scmp.ne.s32.totalorder %s42, %s43
      %p54 = scmp.eq.s32.totalorder %s20, 0
      %p55 = por %p53, %p54
      %p56 = scmp.ne.s32.totalorder %s42, %s43
      %p57 = scmp.eq.s32.totalorder %s21, 3
      %p58 = por %p56, %p57
      %p60 = scmp.ne.s32.totalorder %s43, %s59
      %p61 = scmp.eq.s32.totalorder %s21, 0
      %p62 = por %p60, %p61
      %s64 = sadd.s32 %s63, 1
      %p67 = scmp.eq.s32.totalorder %s15, 3
      %p68 = scmp.ne.s32.totalorder %s63, %s65
      %p69 = scmp.eq.s32.totalorder %s15, 0
      %p70 = por %p68, %p69
      %p71 = scmp.ne.s32.totalorder %s63, %s65
      %p72 = scmp.eq.s32.totalorder %s20, 3
      %p73 = por %p71, %p72
      %p74 = scmp.ne.s32.totalorder %s65, %s66
      %p75 = scmp.eq.s32.totalorder %s20, 0
      %p76 = por %p74, %p75
      %p77 = scmp.ne.s32.totalorder %s65, %s66
      %p78 = scmp.eq.s32.totalorder %s21, 3
      %p79 = por %p77, %p78
      %p81 = scmp.ne.s32.totalorder %s66, %s80
      %p82 = scmp.eq.s32.totalorder %s21, 0
      %p83 = por %p81, %p82
      %s85 = sadd.s32 %s84, 1
      %p88 = scmp.eq.s32.totalorder %s15, 3
      %p89 = scmp.ne.s32.totalorder %s84, %s86
      %p90 = scmp.eq.s32.totalorder %s15, 0
      %p91 = por %p89, %p90
      %p92 = scmp.ne.s32.totalorder %s84, %s86
      %p93 = scmp.eq.s32.totalorder %s20, 3
      %p94 = por %p92, %p93
      %p95 = scmp.ne.s32.totalorder %s86, %s87
      %p96 = scmp.eq.s32.totalorder %s20, 0
      %p97 = por %p95, %p96
      %p98 = scmp.ne.s32.totalorder %s86, %s87
      %p99 = scmp.eq.s32.totalorder %s21, 3
      %p100 = por %p98, %p99
      %p102 = scmp.ne.s32.totalorder %s87, %s101
      %p103 = scmp.eq.s32.totalorder %s21, 0
      %p104 = por %p102, %p103
      %s106 = sadd.s32 %s105, 1
      %p109 = scmp.eq.s32.totalorder %s15, 3
      %p110 = scmp.ne.s32.totalorder %s105, %s107
      %p111 = scmp.eq.s32.totalorder %s15, 0
      %p112 = por %p110, %p111
      %p113 = scmp.ne.s32.totalorder %s105, %s107
      %p114 = scmp.eq.s32.totalorder %s20, 3
      %p115 = por %p113, %p114
      %p116 = scmp.ne.s32.totalorder %s107, %s108
      %p117 = scmp.eq.s32.totalorder %s20, 0
      %p118 = por %p116, %p117
      %p119 = scmp.ne.s32.totalorder %s107, %s108
      %p120 = scmp.eq.s32.totalorder %s21, 3
      %p121 = por %p119, %p120
      %p123 = scmp.ne.s32.totalorder %s108, %s122
      %p124 = scmp.eq.s32.totalorder %s21, 0
      %p125 = por %p123, %p124
      %s127 = sadd.s32 %s126, 1
      %p130 = scmp.eq.s32.totalorder %s15, 3
      %p131 = scmp.ne.s32.totalorder %s126, %s128
      %p132 = scmp.eq.s32.totalorder %s15, 0
      %p133 = por %p131, %p132
      %p134 = scmp.ne.s32.totalorder %s126, %s128
      %p135 = scmp.eq.s32.totalorder %s20, 3
      %p136 = por %p134, %p135
      %p137 = scmp.ne.s32.totalorder %s128, %s129
      %p138 = scmp.eq.s32.totalorder %s20, 0
      %p139 = por %p137, %p138
      %p140 = scmp.ne.s32.totalorder %s128, %s129
      %p141 = scmp.eq.s32.totalorder %s21, 3
      %p142 = por %p140, %p141
      %p144 = scmp.ne.s32.totalorder %s129, %s143
      %p145 = scmp.eq.s32.totalorder %s21, 0
      %p146 = por %p144, %p145
      %s148 = sadd.s32 %s147, 1
      %p151 = scmp.eq.s32.totalorder %s15, 3
      %p152 = scmp.ne.s32.totalorder %s147, %s149
      %p153 = scmp.eq.s32.totalorder %s15, 0
      %p154 = por %p152, %p153
      %p155 = scmp.ne.s32.totalorder %s147, %s149
      %p156 = scmp.eq.s32.totalorder %s20, 3
      %p157 = por %p155, %p156
      %p158 = scmp.ne.s32.totalorder %s149, %s150
      %p159 = scmp.eq.s32.totalorder %s20, 0
      %p160 = por %p158, %p159
      %p161 = scmp.ne.s32.totalorder %s149, %s150
      %p162 = scmp.eq.s32.totalorder %s21, 3
      %p163 = por %p161, %p162
      %p165 = scmp.ne.s32.totalorder %s150, %s164
      %p166 = scmp.eq.s32.totalorder %s21, 0
      %p167 = por %p165, %p166
      %s168 = ssub.s32 %s22, %s34
      %s169 = ssub.s32 %s23, %s30
      %s170 = sor.u32 %s168, %s169
      %p171 = scmp.eq.s32.totalorder %s170, 0
      %s173 = sadd.s32 %s172, 1
      %s174 = scalar_select %p171, %s172, %s173
      %p177 = pneg %p171
      %p178 = scmp.eq.s32.totalorder %s15, 3
      %p179 = por %p177, %p178
      %p180 = scmp.ne.s32.totalorder %s172, %s175
      %p181 = scmp.eq.s32.totalorder %s15, 0
      %p182 = por %p180, %p181
      %p183 = scmp.ne.s32.totalorder %s172, %s175
      %p184 = scmp.eq.s32.totalorder %s20, 3
      %p185 = por %p183, %p184
      %p186 = scmp.ne.s32.totalorder %s175, %s176
      %p187 = scmp.eq.s32.totalorder %s20, 0
      %p188 = por %p186, %p187
      %p189 = scmp.ne.s32.totalorder %s175, %s176
      %p190 = scmp.eq.s32.totalorder %s21, 3
      %p191 = por %p189, %p190
      %p193 = scmp.ne.s32.totalorder %s176, %s192
      %p194 = scmp.eq.s32.totalorder %s21, 0
      %p195 = por %p193, %p194
      %s196 = ssub.s32 %s22, %s34
      %s197 = ssub.s32 %s23, %s30
      %s198 = sor.u32 %s196, %s197
      %p199 = scmp.eq.s32.totalorder %s198, 0
      %s201 = sadd.s32 %s200, 1
      %s202 = scalar_select %p199, %s200, %s201
      %p205 = pneg %p199
      %p206 = scmp.eq.s32.totalorder %s15, 3
      %p207 = por %p205, %p206
      %p208 = scmp.ne.s32.totalorder %s200, %s203
      %p209 = scmp.eq.s32.totalorder %s15, 0
      %p210 = por %p208, %p209
      %p211 = scmp.ne.s32.totalorder %s200, %s203
      %p212 = scmp.eq.s32.totalorder %s20, 3
      %p213 = por %p211, %p212
      %p214 = scmp.ne.s32.totalorder %s203, %s204
      %p215 = scmp.eq.s32.totalorder %s20, 0
      %p216 = por %p214, %p215
      %p217 = scmp.ne.s32.totalorder %s203, %s204
      %p218 = scmp.eq.s32.totalorder %s21, 3
      %p219 = por %p217, %p218
      %p221 = scmp.ne.s32.totalorder %s204, %s220
      %p222 = scmp.eq.s32.totalorder %s21, 0
      %p223 = por %p221, %p222
      %s224 = ssub.s32 %s22, %s34
      %s225 = ssub.s32 %s23, %s30
      %s226 = sor.u32 %s224, %s225
      %p227 = scmp.eq.s32.totalorder %s226, 0
      %s229 = sadd.s32 %s228, 1
      %s230 = scalar_select %p227, %s228, %s229
      %p233 = pneg %p227
      %p234 = scmp.eq.s32.totalorder %s15, 3
      %p235 = por %p233, %p234
      %p236 = scmp.ne.s32.totalorder %s228, %s231
      %p237 = scmp.eq.s32.totalorder %s15, 0
      %p238 = por %p236, %p237
      %p239 = scmp.ne.s32.totalorder %s228, %s231
      %p240 = scmp.eq.s32.totalorder %s20, 3
      %p241 = por %p239, %p240
      %p242 = scmp.ne.s32.totalorder %s231, %s232
      %p243 = scmp.eq.s32.totalorder %s20, 0
      %p244 = por %p242, %p243
      %p245 = scmp.ne.s32.totalorder %s231, %s232
      %p246 = scmp.eq.s32.totalorder %s21, 3
      %p247 = por %p245, %p246
      %p249 = scmp.ne.s32.totalorder %s232, %s248
      %p250 = scmp.eq.s32.totalorder %s21, 0
      %p251 = por %p249, %p250
      %p252 = scmp.le.s32.totalorder 1, %s15
      %p253 = scmp.lt.s32.totalorder %s15, 5
      %p254 = pnand %p252, %p253
      %p255 = pneg %p254
      // Predicated region
      $region9: #{tpu_custom_call.1} parent=5 // pred_check
        _
      $region10: #{tpu_custom_call.1} parent=5 // pred_check_branch
        %257 = sbr.rel (%p254) target = $region12
      $region11: #{tpu_custom_call.1} parent=5 // pred_region
        %s258 = ssub.s32 %s15, 1
        // Predicated region
        $region13: #{tpu_custom_call.1} parent=11 // pred_check
          %p259 = pneg %p76
        $region14: #{tpu_custom_call.1} parent=11 // pred_check_branch
          %261 = sbr.rel (%p259) target = $region16
        $region15: #{tpu_custom_call.1} parent=11 // pred_region
          _
        $region16: #{tpu_custom_call.1} parent=11 // pred_fallthru
          _
        // Predicated region
        $region17: #{tpu_custom_call.1} parent=11 // pred_check
          %p262 = pneg %p97
        $region18: #{tpu_custom_call.1} parent=11 // pred_check_branch
          %264 = sbr.rel (%p262) target = $region20
        $region19: #{tpu_custom_call.1} parent=11 // pred_region
          _
        $region20: #{tpu_custom_call.1} parent=11 // pred_fallthru
          _
        // Predicated region
        $region21: #{tpu_custom_call.1} parent=11 // pred_check
          %p265 = pneg %p118
        $region22: #{tpu_custom_call.1} parent=11 // pred_check_branch
          %267 = sbr.rel (%p265) target = $region24
        $region23: #{tpu_custom_call.1} parent=11 // pred_region
          _
        $region24: #{tpu_custom_call.1} parent=11 // pred_fallthru
          _
        // Predicated region
        $region25: #{tpu_custom_call.1} parent=11 // pred_check
          %p268 = pneg %p139
        $region26: #{tpu_custom_call.1} parent=11 // pred_check_branch
          %270 = sbr.rel (%p268) target = $region28
        $region27: #{tpu_custom_call.1} parent=11 // pred_region
          _
        $region28: #{tpu_custom_call.1} parent=11 // pred_fallthru
          _
        // Predicated region
        $region29: #{tpu_custom_call.1} parent=11 // pred_check
          %p271 = pneg %p160
        $region30: #{tpu_custom_call.1} parent=11 // pred_check_branch
          %273 = sbr.rel (%p271) target = $region32
        $region31: #{tpu_custom_call.1} parent=11 // pred_region
          _
        $region32: #{tpu_custom_call.1} parent=11 // pred_fallthru
          _
      $region12: #{tpu_custom_call.1} parent=5 // pred_fallthru
        _
      %p274 = scmp.lt.s32.totalorder %s15, 4
      // Predicated region
      $region33: #{tpu_custom_call.1} parent=5 // pred_check
        %p275 = pneg %p274
      $region34: #{tpu_custom_call.1} parent=5 // pred_check_branch
        %277 = sbr.rel (%p275) target = $region36
      $region35: #{tpu_custom_call.1} parent=5 // pred_region
        // Predicated region
        $region37: #{tpu_custom_call.1} parent=35 // pred_check
          %p278 = pneg %p49
        $region38: #{tpu_custom_call.1} parent=35 // pred_check_branch
          %280 = sbr.rel (%p278) target = $region40
        $region39: #{tpu_custom_call.1} parent=35 // pred_region
          %p281 = scmp.lt.s32.totalorder %s22, 1
          %s282 = scalar_select %p281, %s22, 1
          %p283 = scmp.lt.s32.totalorder %s23, 1
          %s284 = scalar_select %p283, %s23, 1
          %s285 = smul.addr %s282, 2
          %s286 = sadd.s32 %s284, %s285
          %s287 = smul.addr %s286, 8
          %s288 = scalar_lea.vmem %s0, %s287
        $region40: #{tpu_custom_call.1} parent=35 // pred_fallthru
          _
      $region36: #{tpu_custom_call.1} parent=5 // pred_fallthru
        _
      %p289 = scmp.le.s32.totalorder 1, %s15
      %p290 = scmp.lt.s32.totalorder %s15, 5
      %p291 = pnand %p289, %p290
      %p292 = pneg %p291
      // Predicated region
      $region41: #{tpu_custom_call.1} parent=5 // pred_check
        _
      $region42: #{tpu_custom_call.1} parent=5 // pred_check_branch
        %294 = sbr.rel (%p291) target = $region44
      $region43: #{tpu_custom_call.1} parent=5 // pred_region
        %s295 = ssub.s32 %s15, 1
        %p296 = scmp.lt.s32.totalorder %s24, 1
        %s297 = scalar_select %p296, %s24, 1
        %p298 = scmp.lt.s32.totalorder %s25, 1
        %s299 = scalar_select %p298, %s25, 1
        %s300 = smul.addr %s297, 2
        %s301 = sadd.s32 %s299, %s300
        %s302 = smul.addr %s301, 8
        %s303 = scalar_lea.vmem %s0, %s302
        %p304 = pneg %p55
        %p305 = pneg %p52
        %p306 = pneg %p76
        %p307 = pneg %p73
        %p308 = pneg %p97
        %p309 = pneg %p94
        %p310 = pneg %p118
        %p311 = pneg %p115
        %p312 = pneg %p139
        %p313 = pneg %p136
        %p314 = pneg %p160
        %p315 = pneg %p157
        %p316 = pneg %p188
        %p317 = pneg %p185
        %s318 = sand.u32 %s175, 1
        %s319 = sand.u32 %s175, 1
        %s320 = smul.addr %s319, 32
        %s321 = scalar_lea.vmem [#allocation2], %s320
        %p322 = pneg %p216
        %p323 = pneg %p213
        %s324 = sand.u32 %s203, 1
        %s325 = sand.u32 %s203, 1
        %s326 = smul.addr %s325, 32
        %s327 = scalar_lea.vmem [#allocation3], %s326
        %p328 = pneg %p244
        %p329 = pneg %p241
        %s330 = sand.u32 %s231, 1
        %s331 = sand.u32 %s231, 1
        %s332 = smul.addr %s331, 32
        %s333 = scalar_lea.vmem [#allocation4], %s332
        %p334 = scmp.lt.s32.totalorder %s24, 1
        %s335 = scalar_select %p334, %s24, 1
        %p336 = scmp.lt.s32.totalorder %s25, 1
        %s337 = scalar_select %p336, %s25, 1
        %s338 = smul.addr %s335, 2
        %s339 = sadd.s32 %s337, %s338
        %s340 = smul.addr %s339, 8
        %s341 = scalar_lea.vmem %s0, %s340
        %v342 = vld [vmem:[%s341] sm:$0xff]
        %v343 = vld [vmem:[%s1] sm:$0x1]
        %v344 = vld [vmem:[%s2] sm:$0x1]
        %vm345 = vcmask 261120
        %v346 = vsel %vm345, %v342, 0.0
        %347 = vadd.xlane.f32.xlu0 %v346
        %v348 = vpop.xlane.xlu0 %347
        %v349 = vrcp.pop 32.0
        %v350 = vmul.f32 %v348, %v349
        %v351 = vsub.f32 %v342, %v350
        %v352 = vmul.f32 %v351, %v351
        %v353 = vsel %vm345, %v352, 0.0
        %354 = vadd.xlane.f32.xlu0 %v353
        %v355 = vpop.xlane.xlu0 %354
        %v356 = vmul.f32 %v355, %v349
        %v357 = vadd.f32 %v356, 1e-05
        %v358 = vrsqrt.pop %v357
        %v359 = vmul.f32 %v351, %v358
        %v361 = vlaneseq
        %v362 = vshrl.u32 %v361, 7
        %v363 = vsub.s32 0, %v362
        %v364 = vrot.slane %v343, %v363
        %v366 = vmul.f32 %v359, %v364
        %v368 = vlaneseq
        %v369 = vshrl.u32 %v368, 7
        %v370 = vsub.s32 0, %v369
        %v371 = vrot.slane %v344, %v370
        %v373 = vadd.f32 %v366, %v371
        %v374 = vld [vmem:[%s3] sm:$0xff]
        %v375 = vld [vmem:[%s3 + $0x8] sm:$0xff]
        %v376 = vld [vmem:[%s3 + $0x10] sm:$0xff]
        %v377 = vld [vmem:[%s3 + $0x18] sm:$0xff]
        %v379 = vsel %vm345, %v373, 0
        %381 = vmatprep.subr.mxu0 0.0
        %382 = vmatpush1.msra.mxu0 %v374
        %383 = vmatprep.subr.mxu0 0.0
        %384 = vmatpush1.msra.mxu0 %v375
        %385 = vmatprep.subr.mxu0 0.0
        %386 = vmatpush1.msra.mxu0 %v376
        %387 = vmatprep.subr.mxu0 0.0
        %388 = vmatpush1.msra.mxu0 %v377
        %389 = vmatprep.subr.mxu0 0.0
        %390 = vmatpush1.msra.mxu0 0.0
        %391 = vmatprep.subr.mxu0 0.0
        %392 = vmatpush1.msra.mxu0 0.0
        %393 = vmatprep.subr.mxu0 0.0
        %394 = vmatpush1.msra.mxu0 0.0
        %395 = vmatprep.subr.mxu0 0.0
        %396 = vmatpush1.msra.mxu0 0.0
        %397 = vmatprep.subr.mxu0 0.0
        %398 = vmatpush1.msra.mxu0 0.0
        %399 = vmatprep.subr.mxu0 0.0
        %400 = vmatpush1.msra.mxu0 0.0
        %401 = vmatprep.subr.mxu0 0.0
        %402 = vmatpush1.msra.mxu0 0.0
        %403 = vmatprep.subr.mxu0 0.0
        %404 = vmatpush1.msra.mxu0 0.0
        %405 = vmatprep.subr.mxu0 0.0
        %406 = vmatpush1.msra.mxu0 0.0
        %407 = vmatprep.subr.mxu0 0.0
        %408 = vmatpush1.msra.mxu0 0.0
        %409 = vmatprep.subr.mxu0 0.0
        %410 = vmatpush1.msra.mxu0 0.0
        %411 = vmatprep.subr.mxu0 0.0
        %412 = vmatpush1.msra.mxu0 0.0
        %413 = vmatprep.subr.mxu0 0.0
        %414 = vmatpush1.msra.mxu0 0.0
        %415 = vmatprep.subr.mxu0 0.0
        %416 = vmatpush1.msra.mxu0 0.0
        %417 = vmatprep.subr.mxu0 0.0
        %418 = vmatpush1.msra.mxu0 0.0
        %419 = vmatprep.subr.mxu0 0.0
        %420 = vmatpush1.msra.mxu0 0.0
        %421 = vmatprep.subr.mxu0 0.0
        %422 = vmatpush1.msra.mxu0 0.0
        %423 = vmatprep.subr.mxu0 0.0
        %424 = vmatpush1.msra.mxu0 0.0
        %425 = vmatprep.subr.mxu0 0.0
        %426 = vmatpush1.msra.mxu0 0.0
        %427 = vmatprep.subr.mxu0 0.0
        %428 = vmatpush1.msra.mxu0 0.0
        %429 = vmatprep.subr.mxu0 0.0
        %430 = vmatpush1.msra.mxu0 0.0
        %431 = vmatprep.subr.mxu0 0.0
        %432 = vmatpush1.msra.mxu0 0.0
        %433 = vmatprep.subr.mxu0 0.0
        %434 = vmatpush1.msra.mxu0 0.0
        %435 = vmatprep.subr.mxu0 0.0
        %436 = vmatpush1.msra.mxu0 0.0
        %437 = vmatprep.subr.mxu0 0.0
        %438 = vmatpush1.msra.mxu0 0.0
        %439 = vmatprep.subr.mxu0 0.0
        %440 = vmatpush1.msra.mxu0 0.0
        %441 = vmatprep.subr.mxu0 0.0
        %442 = vmatpush1.msra.mxu0 0.0
        %443 = vmatprep.subr.mxu0 0.0
        %444 = vmatpush1.msra.mxu0 0.0
        %445 = vmatprep.mubr.f32.mxu0 0.0
        %446 = vmatmul.mubr.f32.gmra.mrb[0].mxu0 %v379
        %v447 = vpop.f32.mrb[0].mxu0
        %v448 = vadd.f32 0.0, %v447
        %v449 = vpop.f32.mrb[0].mxu0
        %450 = vdwg.mxu0
        %vm451 = vcmask 64512
        %452 = vst.msk [vmem:[%s321] sm:$0xff] %vm451, %v448
        %v453 = vld [vmem:[%s4] sm:$0xff]
        %v454 = vld [vmem:[%s4 + $0x8] sm:$0xff]
        %v455 = vld [vmem:[%s4 + $0x10] sm:$0xff]
        %v456 = vld [vmem:[%s4 + $0x18] sm:$0xff]
        %457 = vmatprep.subr.mxu0 0.0
        %458 = vmatpush1.msra.mxu0 %v453
        %459 = vmatprep.subr.mxu0 0.0
        %460 = vmatpush1.msra.mxu0 %v454
        %461 = vmatprep.subr.mxu0 0.0
        %462 = vmatpush1.msra.mxu0 %v455
        %463 = vmatprep.subr.mxu0 0.0
        %464 = vmatpush1.msra.mxu0 %v456
        %465 = vmatprep.subr.mxu0 0.0
        %466 = vmatpush1.msra.mxu0 0.0
        %467 = vmatprep.subr.mxu0 0.0
        %468 = vmatpush1.msra.mxu0 0.0
        %469 = vmatprep.subr.mxu0 0.0
        %470 = vmatpush1.msra.mxu0 0.0
        %471 = vmatprep.subr.mxu0 0.0
        %472 = vmatpush1.msra.mxu0 0.0
        %473 = vmatprep.subr.mxu0 0.0
        %474 = vmatpush1.msra.mxu0 0.0
        %475 = vmatprep.subr.mxu0 0.0
        %476 = vmatpush1.msra.mxu0 0.0
        %477 = vmatprep.subr.mxu0 0.0
        %478 = vmatpush1.msra.mxu0 0.0
        %479 = vmatprep.subr.mxu0 0.0
        %480 = vmatpush1.msra.mxu0 0.0
        %481 = vmatprep.subr.mxu0 0.0
        %482 = vmatpush1.msra.mxu0 0.0
        %483 = vmatprep.subr.mxu0 0.0
        %484 = vmatpush1.msra.mxu0 0.0
        %485 = vmatprep.subr.mxu0 0.0
        %486 = vmatpush1.msra.mxu0 0.0
        %487 = vmatprep.subr.mxu0 0.0
        %488 = vmatpush1.msra.mxu0 0.0
        %489 = vmatprep.subr.mxu0 0.0
        %490 = vmatpush1.msra.mxu0 0.0
        %491 = vmatprep.subr.mxu0 0.0
        %492 = vmatpush1.msra.mxu0 0.0
        %493 = vmatprep.subr.mxu0 0.0
        %494 = vmatpush1.msra.mxu0 0.0
        %495 = vmatprep.subr.mxu0 0.0
        %496 = vmatpush1.msra.mxu0 0.0
        %497 = vmatprep.subr.mxu0 0.0
        %498 = vmatpush1.msra.mxu0 0.0
        %499 = vmatprep.subr.mxu0 0.0
        %500 = vmatpush1.msra.mxu0 0.0
        %501 = vmatprep.subr.mxu0 0.0
        %502 = vmatpush1.msra.mxu0 0.0
        %503 = vmatprep.subr.mxu0 0.0
        %504 = vmatpush1.msra.mxu0 0.0
        %505 = vmatprep.subr.mxu0 0.0
        %506 = vmatpush1.msra.mxu0 0.0
        %507 = vmatprep.subr.mxu0 0.0
        %508 = vmatpush1.msra.mxu0 0.0
        %509 = vmatprep.subr.mxu0 0.0
        %510 = vmatpush1.msra.mxu0 0.0
        %511 = vmatprep.subr.mxu0 0.0
        %512 = vmatpush1.msra.mxu0 0.0
        %513 = vmatprep.subr.mxu0 0.0
        %514 = vmatpush1.msra.mxu0 0.0
        %515 = vmatprep.subr.mxu0 0.0
        %516 = vmatpush1.msra.mxu0 0.0
        %517 = vmatprep.subr.mxu0 0.0
        %518 = vmatpush1.msra.mxu0 0.0
        %519 = vmatprep.subr.mxu0 0.0
        %520 = vmatpush1.msra.mxu0 0.0
        %521 = vmatprep.mubr.f32.mxu0 0.0
        %522 = vmatmul.mubr.f32.gmra.mrb[0].mxu0 %v379
        %v523 = vpop.f32.mrb[0].mxu0
        %v524 = vadd.f32 0.0, %v523
        %v525 = vpop.f32.mrb[0].mxu0
        %526 = vdwg.mxu0
        %527 = vst.msk [vmem:[%s327] sm:$0xff] %vm451, %v524
        %v528 = vld [vmem:[%s5] sm:$0xff]
        %v529 = vld [vmem:[%s5 + $0x8] sm:$0xff]
        %v530 = vld [vmem:[%s5 + $0x10] sm:$0xff]
        %v531 = vld [vmem:[%s5 + $0x18] sm:$0xff]
        %532 = vmatprep.subr.mxu0 0.0
        %533 = vmatpush1.msra.mxu0 %v528
        %534 = vmatprep.subr.mxu0 0.0
        %535 = vmatpush1.msra.mxu0 %v529
        %536 = vmatprep.subr.mxu0 0.0
        %537 = vmatpush1.msra.mxu0 %v530
        %538 = vmatprep.subr.mxu0 0.0
        %539 = vmatpush1.msra.mxu0 %v531
        %540 = vmatprep.subr.mxu0 0.0
        %541 = vmatpush1.msra.mxu0 0.0
        %542 = vmatprep.subr.mxu0 0.0
        %543 = vmatpush1.msra.mxu0 0.0
        %544 = vmatprep.subr.mxu0 0.0
        %545 = vmatpush1.msra.mxu0 0.0
        %546 = vmatprep.subr.mxu0 0.0
        %547 = vmatpush1.msra.mxu0 0.0
        %548 = vmatprep.subr.mxu0 0.0
        %549 = vmatpush1.msra.mxu0 0.0
        %550 = vmatprep.subr.mxu0 0.0
        %551 = vmatpush1.msra.mxu0 0.0
        %552 = vmatprep.subr.mxu0 0.0
        %553 = vmatpush1.msra.mxu0 0.0
        %554 = vmatprep.subr.mxu0 0.0
        %555 = vmatpush1.msra.mxu0 0.0
        %556 = vmatprep.subr.mxu0 0.0
        %557 = vmatpush1.msra.mxu0 0.0
        %558 = vmatprep.subr.mxu0 0.0
        %559 = vmatpush1.msra.mxu0 0.0
        %560 = vmatprep.subr.mxu0 0.0
        %561 = vmatpush1.msra.mxu0 0.0
        %562 = vmatprep.subr.mxu0 0.0
        %563 = vmatpush1.msra.mxu0 0.0
        %564 = vmatprep.subr.mxu0 0.0
        %565 = vmatpush1.msra.mxu0 0.0
        %566 = vmatprep.subr.mxu0 0.0
        %567 = vmatpush1.msra.mxu0 0.0
        %568 = vmatprep.subr.mxu0 0.0
        %569 = vmatpush1.msra.mxu0 0.0
        %570 = vmatprep.subr.mxu0 0.0
        %571 = vmatpush1.msra.mxu0 0.0
        %572 = vmatprep.subr.mxu0 0.0
        %573 = vmatpush1.msra.mxu0 0.0
        %574 = vmatprep.subr.mxu0 0.0
        %575 = vmatpush1.msra.mxu0 0.0
        %576 = vmatprep.subr.mxu0 0.0
        %577 = vmatpush1.msra.mxu0 0.0
        %578 = vmatprep.subr.mxu0 0.0
        %579 = vmatpush1.msra.mxu0 0.0
        %580 = vmatprep.subr.mxu0 0.0
        %581 = vmatpush1.msra.mxu0 0.0
        %582 = vmatprep.subr.mxu0 0.0
        %583 = vmatpush1.msra.mxu0 0.0
        %584 = vmatprep.subr.mxu0 0.0
        %585 = vmatpush1.msra.mxu0 0.0
        %586 = vmatprep.subr.mxu0 0.0
        %587 = vmatpush1.msra.mxu0 0.0
        %588 = vmatprep.subr.mxu0 0.0
        %589 = vmatpush1.msra.mxu0 0.0
        %590 = vmatprep.subr.mxu0 0.0
        %591 = vmatpush1.msra.mxu0 0.0
        %592 = vmatprep.subr.mxu0 0.0
        %593 = vmatpush1.msra.mxu0 0.0
        %594 = vmatprep.subr.mxu0 0.0
        %595 = vmatpush1.msra.mxu0 0.0
        %596 = vmatprep.mubr.f32.mxu0 0.0
        %597 = vmatmul.mubr.f32.gmra.mrb[0].mxu0 %v379
        %v598 = vpop.f32.mrb[0].mxu0
        %v599 = vadd.f32 0.0, %v598
        %v600 = vpop.f32.mrb[0].mxu0
        %601 = vdwg.mxu0
        %602 = vst.msk [vmem:[%s333] sm:$0xff] %vm451, %v599
        %s603 = scalar_lea.vmem %s3, 32
        %v604 = vld [vmem:[%s603] sm:$0xff]
        %v605 = vld [vmem:[%s603 + $0x8] sm:$0xff]
        %v606 = vld [vmem:[%s603 + $0x10] sm:$0xff]
        %v607 = vld [vmem:[%s603 + $0x18] sm:$0xff]
        %608 = vmatprep.subr.mxu0 0.0
        %609 = vmatpush1.msra.mxu0 %v604
        %610 = vmatprep.subr.mxu0 0.0
        %611 = vmatpush1.msra.mxu0 %v605
        %612 = vmatprep.subr.mxu0 0.0
        %613 = vmatpush1.msra.mxu0 %v606
        %614 = vmatprep.subr.mxu0 0.0
        %615 = vmatpush1.msra.mxu0 %v607
        %616 = vmatprep.subr.mxu0 0.0
        %617 = vmatpush1.msra.mxu0 0.0
        %618 = vmatprep.subr.mxu0 0.0
        %619 = vmatpush1.msra.mxu0 0.0
        %620 = vmatprep.subr.mxu0 0.0
        %621 = vmatpush1.msra.mxu0 0.0
        %622 = vmatprep.subr.mxu0 0.0
        %623 = vmatpush1.msra.mxu0 0.0
        %624 = vmatprep.subr.mxu0 0.0
        %625 = vmatpush1.msra.mxu0 0.0
        %626 = vmatprep.subr.mxu0 0.0
        %627 = vmatpush1.msra.mxu0 0.0
        %628 = vmatprep.subr.mxu0 0.0
        %629 = vmatpush1.msra.mxu0 0.0
        %630 = vmatprep.subr.mxu0 0.0
        %631 = vmatpush1.msra.mxu0 0.0
        %632 = vmatprep.subr.mxu0 0.0
        %633 = vmatpush1.msra.mxu0 0.0
        %634 = vmatprep.subr.mxu0 0.0
        %635 = vmatpush1.msra.mxu0 0.0
        %636 = vmatprep.subr.mxu0 0.0
        %637 = vmatpush1.msra.mxu0 0.0
        %638 = vmatprep.subr.mxu0 0.0
        %639 = vmatpush1.msra.mxu0 0.0
        %640 = vmatprep.subr.mxu0 0.0
        %641 = vmatpush1.msra.mxu0 0.0
        %642 = vmatprep.subr.mxu0 0.0
        %643 = vmatpush1.msra.mxu0 0.0
        %644 = vmatprep.subr.mxu0 0.0
        %645 = vmatpush1.msra.mxu0 0.0
        %646 = vmatprep.subr.mxu0 0.0
        %647 = vmatpush1.msra.mxu0 0.0
        %648 = vmatprep.subr.mxu0 0.0
        %649 = vmatpush1.msra.mxu0 0.0
        %650 = vmatprep.subr.mxu0 0.0
        %651 = vmatpush1.msra.mxu0 0.0
        %652 = vmatprep.subr.mxu0 0.0
        %653 = vmatpush1.msra.mxu0 0.0
        %654 = vmatprep.subr.mxu0 0.0
        %655 = vmatpush1.msra.mxu0 0.0
        %656 = vmatprep.subr.mxu0 0.0
        %657 = vmatpush1.msra.mxu0 0.0
        %658 = vmatprep.subr.mxu0 0.0
        %659 = vmatpush1.msra.mxu0 0.0
        %660 = vmatprep.subr.mxu0 0.0
        %661 = vmatpush1.msra.mxu0 0.0
        %662 = vmatprep.subr.mxu0 0.0
        %663 = vmatpush1.msra.mxu0 0.0
        %664 = vmatprep.subr.mxu0 0.0
        %665 = vmatpush1.msra.mxu0 0.0
        %666 = vmatprep.subr.mxu0 0.0
        %667 = vmatpush1.msra.mxu0 0.0
        %668 = vmatprep.subr.mxu0 0.0
        %669 = vmatpush1.msra.mxu0 0.0
        %670 = vmatprep.subr.mxu0 0.0
        %671 = vmatpush1.msra.mxu0 0.0
        %672 = vmatprep.mubr.f32.mxu0 0.0
        %673 = vmatmul.mubr.f32.gmra.mrb[0].mxu0 %v379
        %v674 = vpop.f32.mrb[0].mxu0
        %v675 = vadd.f32 0.0, %v674
        %v676 = vpop.f32.mrb[0].mxu0
        %677 = vdwg.mxu0
        %s678 = scalar_lea.vmem %s321, 8 [#allocation2]
        %679 = vst.msk [vmem:[%s678] sm:$0xff] %vm451, %v675
        %s680 = scalar_lea.vmem %s4, 32
        %v681 = vld [vmem:[%s680] sm:$0xff]
        %v682 = vld [vmem:[%s680 + $0x8] sm:$0xff]
        %v683 = vld [vmem:[%s680 + $0x10] sm:$0xff]
        %v684 = vld [vmem:[%s680 + $0x18] sm:$0xff]
        %685 = vmatprep.subr.mxu0 0.0
        %686 = vmatpush1.msra.mxu0 %v681
        %687 = vmatprep.subr.mxu0 0.0
        %688 = vmatpush1.msra.mxu0 %v682
        %689 = vmatprep.subr.mxu0 0.0
        %690 = vmatpush1.msra.mxu0 %v683
        %691 = vmatprep.subr.mxu0 0.0
        %692 = vmatpush1.msra.mxu0 %v684
        %693 = vmatprep.subr.mxu0 0.0
        %694 = vmatpush1.msra.mxu0 0.0
        %695 = vmatprep.subr.mxu0 0.0
        %696 = vmatpush1.msra.mxu0 0.0
        %697 = vmatprep.subr.mxu0 0.0
        %698 = vmatpush1.msra.mxu0 0.0
        %699 = vmatprep.subr.mxu0 0.0
        %700 = vmatpush1.msra.mxu0 0.0
        %701 = vmatprep.subr.mxu0 0.0
        %702 = vmatpush1.msra.mxu0 0.0
        %703 = vmatprep.subr.mxu0 0.0
        %704 = vmatpush1.msra.mxu0 0.0
        %705 = vmatprep.subr.mxu0 0.0
        %706 = vmatpush1.msra.mxu0 0.0
        %707 = vmatprep.subr.mxu0 0.0
        %708 = vmatpush1.msra.mxu0 0.0
        %709 = vmatprep.subr.mxu0 0.0
        %710 = vmatpush1.msra.mxu0 0.0
        %711 = vmatprep.subr.mxu0 0.0
        %712 = vmatpush1.msra.mxu0 0.0
        %713 = vmatprep.subr.mxu0 0.0
        %714 = vmatpush1.msra.mxu0 0.0
        %715 = vmatprep.subr.mxu0 0.0
        %716 = vmatpush1.msra.mxu0 0.0
        %717 = vmatprep.subr.mxu0 0.0
        %718 = vmatpush1.msra.mxu0 0.0
        %719 = vmatprep.subr.mxu0 0.0
        %720 = vmatpush1.msra.mxu0 0.0
        %721 = vmatprep.subr.mxu0 0.0
        %722 = vmatpush1.msra.mxu0 0.0
        %723 = vmatprep.subr.mxu0 0.0
        %724 = vmatpush1.msra.mxu0 0.0
        %725 = vmatprep.subr.mxu0 0.0
        %726 = vmatpush1.msra.mxu0 0.0
        %727 = vmatprep.subr.mxu0 0.0
        %728 = vmatpush1.msra.mxu0 0.0
        %729 = vmatprep.subr.mxu0 0.0
        %730 = vmatpush1.msra.mxu0 0.0
        %731 = vmatprep.subr.mxu0 0.0
        %732 = vmatpush1.msra.mxu0 0.0
        %733 = vmatprep.subr.mxu0 0.0
        %734 = vmatpush1.msra.mxu0 0.0
        %735 = vmatprep.subr.mxu0 0.0
        %736 = vmatpush1.msra.mxu0 0.0
        %737 = vmatprep.subr.mxu0 0.0
        %738 = vmatpush1.msra.mxu0 0.0
        %739 = vmatprep.subr.mxu0 0.0
        %740 = vmatpush1.msra.mxu0 0.0
        %741 = vmatprep.subr.mxu0 0.0
        %742 = vmatpush1.msra.mxu0 0.0
        %743 = vmatprep.subr.mxu0 0.0
        %744 = vmatpush1.msra.mxu0 0.0
        %745 = vmatprep.subr.mxu0 0.0
        %746 = vmatpush1.msra.mxu0 0.0
        %747 = vmatprep.subr.mxu0 0.0
        %748 = vmatpush1.msra.mxu0 0.0
        %749 = vmatprep.mubr.f32.mxu0 0.0
        %750 = vmatmul.mubr.f32.gmra.mrb[0].mxu0 %v379
        %v751 = vpop.f32.mrb[0].mxu0
        %v752 = vadd.f32 0.0, %v751
        %v753 = vpop.f32.mrb[0].mxu0
        %754 = vdwg.mxu0
        %s755 = scalar_lea.vmem %s327, 8 [#allocation3]
        %756 = vst.msk [vmem:[%s755] sm:$0xff] %vm451, %v752
        %s757 = scalar_lea.vmem %s5, 32
        %v758 = vld [vmem:[%s757] sm:$0xff]
        %v759 = vld [vmem:[%s757 + $0x8] sm:$0xff]
        %v760 = vld [vmem:[%s757 + $0x10] sm:$0xff]
        %v761 = vld [vmem:[%s757 + $0x18] sm:$0xff]
        %762 = vmatprep.subr.mxu0 0.0
        %763 = vmatpush1.msra.mxu0 %v758
        %764 = vmatprep.subr.mxu0 0.0
        %765 = vmatpush1.msra.mxu0 %v759
        %766 = vmatprep.subr.mxu0 0.0
        %767 = vmatpush1.msra.mxu0 %v760
        %768 = vmatprep.subr.mxu0 0.0
        %769 = vmatpush1.msra.mxu0 %v761
        %770 = vmatprep.subr.mxu0 0.0
        %771 = vmatpush1.msra.mxu0 0.0
        %772 = vmatprep.subr.mxu0 0.0
        %773 = vmatpush1.msra.mxu0 0.0
        %774 = vmatprep.subr.mxu0 0.0
        %775 = vmatpush1.msra.mxu0 0.0
        %776 = vmatprep.subr.mxu0 0.0
        %777 = vmatpush1.msra.mxu0 0.0
        %778 = vmatprep.subr.mxu0 0.0
        %779 = vmatpush1.msra.mxu0 0.0
        %780 = vmatprep.subr.mxu0 0.0
        %781 = vmatpush1.msra.mxu0 0.0
        %782 = vmatprep.subr.mxu0 0.0
        %783 = vmatpush1.msra.mxu0 0.0
        %784 = vmatprep.subr.mxu0 0.0
        %785 = vmatpush1.msra.mxu0 0.0
        %786 = vmatprep.subr.mxu0 0.0
        %787 = vmatpush1.msra.mxu0 0.0
        %788 = vmatprep.subr.mxu0 0.0
        %789 = vmatpush1.msra.mxu0 0.0
        %790 = vmatprep.subr.mxu0 0.0
        %791 = vmatpush1.msra.mxu0 0.0
        %792 = vmatprep.subr.mxu0 0.0
        %793 = vmatpush1.msra.mxu0 0.0
        %794 = vmatprep.subr.mxu0 0.0
        %795 = vmatpush1.msra.mxu0 0.0
        %796 = vmatprep.subr.mxu0 0.0
        %797 = vmatpush1.msra.mxu0 0.0
        %798 = vmatprep.subr.mxu0 0.0
        %799 = vmatpush1.msra.mxu0 0.0
        %800 = vmatprep.subr.mxu0 0.0
        %801 = vmatpush1.msra.mxu0 0.0
        %802 = vmatprep.subr.mxu0 0.0
        %803 = vmatpush1.msra.mxu0 0.0
        %804 = vmatprep.subr.mxu0 0.0
        %805 = vmatpush1.msra.mxu0 0.0
        %806 = vmatprep.subr.mxu0 0.0
        %807 = vmatpush1.msra.mxu0 0.0
        %808 = vmatprep.subr.mxu0 0.0
        %809 = vmatpush1.msra.mxu0 0.0
        %810 = vmatprep.subr.mxu0 0.0
        %811 = vmatpush1.msra.mxu0 0.0
        %812 = vmatprep.subr.mxu0 0.0
        %813 = vmatpush1.msra.mxu0 0.0
        %814 = vmatprep.subr.mxu0 0.0
        %815 = vmatpush1.msra.mxu0 0.0
        %816 = vmatprep.subr.mxu0 0.0
        %817 = vmatpush1.msra.mxu0 0.0
        %818 = vmatprep.subr.mxu0 0.0
        %819 = vmatpush1.msra.mxu0 0.0
        %820 = vmatprep.subr.mxu0 0.0
        %821 = vmatpush1.msra.mxu0 0.0
        %822 = vmatprep.subr.mxu0 0.0
        %823 = vmatpush1.msra.mxu0 0.0
        %824 = vmatprep.subr.mxu0 0.0
        %825 = vmatpush1.msra.mxu0 0.0
        %826 = vmatprep.mubr.f32.mxu0 0.0
        %827 = vmatmul.mubr.f32.gmra.mrb[0].mxu0 %v379
        %v828 = vpop.f32.mrb[0].mxu0
        %v829 = vadd.f32 0.0, %v828
        %v830 = vpop.f32.mrb[0].mxu0
        %831 = vdwg.mxu0
        %s832 = scalar_lea.vmem %s333, 8 [#allocation4]
        %833 = vst.msk [vmem:[%s832] sm:$0xff] %vm451, %v829
        %s834 = scalar_lea.vmem %s3, 64
        %v835 = vld [vmem:[%s834] sm:$0xff]
        %v836 = vld [vmem:[%s834 + $0x8] sm:$0xff]
        %v837 = vld [vmem:[%s834 + $0x10] sm:$0xff]
        %v838 = vld [vmem:[%s834 + $0x18] sm:$0xff]
        %839 = vmatprep.subr.mxu0 0.0
        %840 = vmatpush1.msra.mxu0 %v835
        %841 = vmatprep.subr.mxu0 0.0
        %842 = vmatpush1.msra.mxu0 %v836
        %843 = vmatprep.subr.mxu0 0.0
        %844 = vmatpush1.msra.mxu0 %v837
        %845 = vmatprep.subr.mxu0 0.0
        %846 = vmatpush1.msra.mxu0 %v838
        %847 = vmatprep.subr.mxu0 0.0
        %848 = vmatpush1.msra.mxu0 0.0
        %849 = vmatprep.subr.mxu0 0.0
        %850 = vmatpush1.msra.mxu0 0.0
        %851 = vmatprep.subr.mxu0 0.0
        %852 = vmatpush1.msra.mxu0 0.0
        %853 = vmatprep.subr.mxu0 0.0
        %854 = vmatpush1.msra.mxu0 0.0
        %855 = vmatprep.subr.mxu0 0.0
        %856 = vmatpush1.msra.mxu0 0.0
        %857 = vmatprep.subr.mxu0 0.0
        %858 = vmatpush1.msra.mxu0 0.0
        %859 = vmatprep.subr.mxu0 0.0
        %860 = vmatpush1.msra.mxu0 0.0
        %861 = vmatprep.subr.mxu0 0.0
        %862 = vmatpush1.msra.mxu0 0.0
        %863 = vmatprep.subr.mxu0 0.0
        %864 = vmatpush1.msra.mxu0 0.0
        %865 = vmatprep.subr.mxu0 0.0
        %866 = vmatpush1.msra.mxu0 0.0
        %867 = vmatprep.subr.mxu0 0.0
        %868 = vmatpush1.msra.mxu0 0.0
        %869 = vmatprep.subr.mxu0 0.0
        %870 = vmatpush1.msra.mxu0 0.0
        %871 = vmatprep.subr.mxu0 0.0
        %872 = vmatpush1.msra.mxu0 0.0
        %873 = vmatprep.subr.mxu0 0.0
        %874 = vmatpush1.msra.mxu0 0.0
        %875 = vmatprep.subr.mxu0 0.0
        %876 = vmatpush1.msra.mxu0 0.0
        %877 = vmatprep.subr.mxu0 0.0
        %878 = vmatpush1.msra.mxu0 0.0
        %879 = vmatprep.subr.mxu0 0.0
        %880 = vmatpush1.msra.mxu0 0.0
        %881 = vmatprep.subr.mxu0 0.0
        %882 = vmatpush1.msra.mxu0 0.0
        %883 = vmatprep.subr.mxu0 0.0
        %884 = vmatpush1.msra.mxu0 0.0
        %885 = vmatprep.subr.mxu0 0.0
        %886 = vmatpush1.msra.mxu0 0.0
        %887 = vmatprep.subr.mxu0 0.0
        %888 = vmatpush1.msra.mxu0 0.0
        %889 = vmatprep.subr.mxu0 0.0
        %890 = vmatpush1.msra.mxu0 0.0
        %891 = vmatprep.subr.mxu0 0.0
        %892 = vmatpush1.msra.mxu0 0.0
        %893 = vmatprep.subr.mxu0 0.0
        %894 = vmatpush1.msra.mxu0 0.0
        %895 = vmatprep.subr.mxu0 0.0
        %896 = vmatpush1.msra.mxu0 0.0
        %897 = vmatprep.subr.mxu0 0.0
        %898 = vmatpush1.msra.mxu0 0.0
        %899 = vmatprep.subr.mxu0 0.0
        %900 = vmatpush1.msra.mxu0 0.0
        %901 = vmatprep.subr.mxu0 0.0
        %902 = vmatpush1.msra.mxu0 0.0
        %903 = vmatprep.mubr.f32.mxu0 0.0
        %904 = vmatmul.mubr.f32.gmra.mrb[0].mxu0 %v379
        %v905 = vpop.f32.mrb[0].mxu0
        %v906 = vadd.f32 0.0, %v905
        %v907 = vpop.f32.mrb[0].mxu0
        %908 = vdwg.mxu0
        %s909 = scalar_lea.vmem %s321, 16 [#allocation2]
        %910 = vst.msk [vmem:[%s909] sm:$0xff] %vm451, %v906
        %s911 = scalar_lea.vmem %s4, 64
        %v912 = vld [vmem:[%s911] sm:$0xff]
        %v913 = vld [vmem:[%s911 + $0x8] sm:$0xff]
        %v914 = vld [vmem:[%s911 + $0x10] sm:$0xff]
        %v915 = vld [vmem:[%s911 + $0x18] sm:$0xff]
        %916 = vmatprep.subr.mxu0 0.0
        %917 = vmatpush1.msra.mxu0 %v912
        %918 = vmatprep.subr.mxu0 0.0
        %919 = vmatpush1.msra.mxu0 %v913
        %920 = vmatprep.subr.mxu0 0.0
        %921 = vmatpush1.msra.mxu0 %v914
        %922 = vmatprep.subr.mxu0 0.0
        %923 = vmatpush1.msra.mxu0 %v915
        %924 = vmatprep.subr.mxu0 0.0
        %925 = vmatpush1.msra.mxu0 0.0
        %926 = vmatprep.subr.mxu0 0.0
        %927 = vmatpush1.msra.mxu0 0.0
        %928 = vmatprep.subr.mxu0 0.0
        %929 = vmatpush1.msra.mxu0 0.0
        %930 = vmatprep.subr.mxu0 0.0
        %931 = vmatpush1.msra.mxu0 0.0
        %932 = vmatprep.subr.mxu0 0.0
        %933 = vmatpush1.msra.mxu0 0.0
        %934 = vmatprep.subr.mxu0 0.0
        %935 = vmatpush1.msra.mxu0 0.0
        %936 = vmatprep.subr.mxu0 0.0
        %937 = vmatpush1.msra.mxu0 0.0
        %938 = vmatprep.subr.mxu0 0.0
        %939 = vmatpush1.msra.mxu0 0.0
        %940 = vmatprep.subr.mxu0 0.0
        %941 = vmatpush1.msra.mxu0 0.0
        %942 = vmatprep.subr.mxu0 0.0
        %943 = vmatpush1.msra.mxu0 0.0
        %944 = vmatprep.subr.mxu0 0.0
        %945 = vmatpush1.msra.mxu0 0.0
        %946 = vmatprep.subr.mxu0 0.0
        %947 = vmatpush1.msra.mxu0 0.0
        %948 = vmatprep.subr.mxu0 0.0
        %949 = vmatpush1.msra.mxu0 0.0
        %950 = vmatprep.subr.mxu0 0.0
        %951 = vmatpush1.msra.mxu0 0.0
        %952 = vmatprep.subr.mxu0 0.0
        %953 = vmatpush1.msra.mxu0 0.0
        %954 = vmatprep.subr.mxu0 0.0
        %955 = vmatpush1.msra.mxu0 0.0
        %956 = vmatprep.subr.mxu0 0.0
        %957 = vmatpush1.msra.mxu0 0.0
        %958 = vmatprep.subr.mxu0 0.0
        %959 = vmatpush1.msra.mxu0 0.0
        %960 = vmatprep.subr.mxu0 0.0
        %961 = vmatpush1.msra.mxu0 0.0
        %962 = vmatprep.subr.mxu0 0.0
        %963 = vmatpush1.msra.mxu0 0.0
        %964 = vmatprep.subr.mxu0 0.0
        %965 = vmatpush1.msra.mxu0 0.0
        %966 = vmatprep.subr.mxu0 0.0
        %967 = vmatpush1.msra.mxu0 0.0
        %968 = vmatprep.subr.mxu0 0.0
        %969 = vmatpush1.msra.mxu0 0.0
        %970 = vmatprep.subr.mxu0 0.0
        %971 = vmatpush1.msra.mxu0 0.0
        %972 = vmatprep.subr.mxu0 0.0
        %973 = vmatpush1.msra.mxu0 0.0
        %974 = vmatprep.subr.mxu0 0.0
        %975 = vmatpush1.msra.mxu0 0.0
        %976 = vmatprep.subr.mxu0 0.0
        %977 = vmatpush1.msra.mxu0 0.0
        %978 = vmatprep.subr.mxu0 0.0
        %979 = vmatpush1.msra.mxu0 0.0
        %980 = vmatprep.mubr.f32.mxu0 0.0
        %981 = vmatmul.mubr.f32.gmra.mrb[0].mxu0 %v379
        %v982 = vpop.f32.mrb[0].mxu0
        %v983 = vadd.f32 0.0, %v982
        %v984 = vpop.f32.mrb[0].mxu0
        %985 = vdwg.mxu0
        %s986 = scalar_lea.vmem %s327, 16 [#allocation3]
        %987 = vst.msk [vmem:[%s986] sm:$0xff] %vm451, %v983
        %s988 = scalar_lea.vmem %s5, 64
        %v989 = vld [vmem:[%s988] sm:$0xff]
        %v990 = vld [vmem:[%s988 + $0x8] sm:$0xff]
        %v991 = vld [vmem:[%s988 + $0x10] sm:$0xff]
        %v992 = vld [vmem:[%s988 + $0x18] sm:$0xff]
        %993 = vmatprep.subr.mxu0 0.0
        %994 = vmatpush1.msra.mxu0 %v989
        %995 = vmatprep.subr.mxu0 0.0
        %996 = vmatpush1.msra.mxu0 %v990
        %997 = vmatprep.subr.mxu0 0.0
        %998 = vmatpush1.msra.mxu0 %v991
        %999 = vmatprep.subr.mxu0 0.0
        %1000 = vmatpush1.msra.mxu0 %v992
        %1001 = vmatprep.subr.mxu0 0.0
        %1002 = vmatpush1.msra.mxu0 0.0
        %1003 = vmatprep.subr.mxu0 0.0
        %1004 = vmatpush1.msra.mxu0 0.0
        %1005 = vmatprep.subr.mxu0 0.0
        %1006 = vmatpush1.msra.mxu0 0.0
        %1007 = vmatprep.subr.mxu0 0.0
        %1008 = vmatpush1.msra.mxu0 0.0
        %1009 = vmatprep.subr.mxu0 0.0
        %1010 = vmatpush1.msra.mxu0 0.0
        %1011 = vmatprep.subr.mxu0 0.0
        %1012 = vmatpush1.msra.mxu0 0.0
        %1013 = vmatprep.subr.mxu0 0.0
        %1014 = vmatpush1.msra.mxu0 0.0
        %1015 = vmatprep.subr.mxu0 0.0
        %1016 = vmatpush1.msra.mxu0 0.0
        %1017 = vmatprep.subr.mxu0 0.0
        %1018 = vmatpush1.msra.mxu0 0.0
        %1019 = vmatprep.subr.mxu0 0.0
        %1020 = vmatpush1.msra.mxu0 0.0
        %1021 = vmatprep.subr.mxu0 0.0
        %1022 = vmatpush1.msra.mxu0 0.0
        %1023 = vmatprep.subr.mxu0 0.0
        %1024 = vmatpush1.msra.mxu0 0.0
        %1025 = vmatprep.subr.mxu0 0.0
        %1026 = vmatpush1.msra.mxu0 0.0
        %1027 = vmatprep.subr.mxu0 0.0
        %1028 = vmatpush1.msra.mxu0 0.0
        %1029 = vmatprep.subr.mxu0 0.0
        %1030 = vmatpush1.msra.mxu0 0.0
        %1031 = vmatprep.subr.mxu0 0.0
        %1032 = vmatpush1.msra.mxu0 0.0
        %1033 = vmatprep.subr.mxu0 0.0
        %1034 = vmatpush1.msra.mxu0 0.0
        %1035 = vmatprep.subr.mxu0 0.0
        %1036 = vmatpush1.msra.mxu0 0.0
        %1037 = vmatprep.subr.mxu0 0.0
        %1038 = vmatpush1.msra.mxu0 0.0
        %1039 = vmatprep.subr.mxu0 0.0
        %1040 = vmatpush1.msra.mxu0 0.0
        %1041 = vmatprep.subr.mxu0 0.0
        %1042 = vmatpush1.msra.mxu0 0.0
        %1043 = vmatprep.subr.mxu0 0.0
        %1044 = vmatpush1.msra.mxu0 0.0
        %1045 = vmatprep.subr.mxu0 0.0
        %1046 = vmatpush1.msra.mxu0 0.0
        %1047 = vmatprep.subr.mxu0 0.0
        %1048 = vmatpush1.msra.mxu0 0.0
        %1049 = vmatprep.subr.mxu0 0.0
        %1050 = vmatpush1.msra.mxu0 0.0
        %1051 = vmatprep.subr.mxu0 0.0
        %1052 = vmatpush1.msra.mxu0 0.0
        %1053 = vmatprep.subr.mxu0 0.0
        %1054 = vmatpush1.msra.mxu0 0.0
        %1055 = vmatprep.subr.mxu0 0.0
        %1056 = vmatpush1.msra.mxu0 0.0
        %1057 = vmatprep.mubr.f32.mxu0 0.0
        %1058 = vmatmul.mubr.f32.gmra.mrb[0].mxu0 %v379
        %v1059 = vpop.f32.mrb[0].mxu0
        %v1060 = vadd.f32 0.0, %v1059
        %v1061 = vpop.f32.mrb[0].mxu0
        %1062 = vdwg.mxu0
        %s1063 = scalar_lea.vmem %s333, 16 [#allocation4]
        %1064 = vst.msk [vmem:[%s1063] sm:$0xff] %vm451, %v1060
        %s1065 = scalar_lea.vmem %s3, 96
        %v1066 = vld [vmem:[%s1065] sm:$0xff]
        %v1067 = vld [vmem:[%s1065 + $0x8] sm:$0xff]
        %v1068 = vld [vmem:[%s1065 + $0x10] sm:$0xff]
        %v1069 = vld [vmem:[%s1065 + $0x18] sm:$0xff]
        %1070 = vmatprep.subr.mxu0 0.0
        %1071 = vmatpush1.msra.mxu0 %v1066
        %1072 = vmatprep.subr.mxu0 0.0
        %1073 = vmatpush1.msra.mxu0 %v1067
        %1074 = vmatprep.subr.mxu0 0.0
        %1075 = vmatpush1.msra.mxu0 %v1068
        %1076 = vmatprep.subr.mxu0 0.0
        %1077 = vmatpush1.msra.mxu0 %v1069
        %1078 = vmatprep.subr.mxu0 0.0
        %1079 = vmatpush1.msra.mxu0 0.0
        %1080 = vmatprep.subr.mxu0 0.0
        %1081 = vmatpush1.msra.mxu0 0.0
        %1082 = vmatprep.subr.mxu0 0.0
        %1083 = vmatpush1.msra.mxu0 0.0
        %1084 = vmatprep.subr.mxu0 0.0
        %1085 = vmatpush1.msra.mxu0 0.0
        %1086 = vmatprep.subr.mxu0 0.0
        %1087 = vmatpush1.msra.mxu0 0.0
        %1088 = vmatprep.subr.mxu0 0.0
        %1089 = vmatpush1.msra.mxu0 0.0
        %1090 = vmatprep.subr.mxu0 0.0
        %1091 = vmatpush1.msra.mxu0 0.0
        %1092 = vmatprep.subr.mxu0 0.0
        %1093 = vmatpush1.msra.mxu0 0.0
        %1094 = vmatprep.subr.mxu0 0.0
        %1095 = vmatpush1.msra.mxu0 0.0
        %1096 = vmatprep.subr.mxu0 0.0
        %1097 = vmatpush1.msra.mxu0 0.0
        %1098 = vmatprep.subr.mxu0 0.0
        %1099 = vmatpush1.msra.mxu0 0.0
        %1100 = vmatprep.subr.mxu0 0.0
        %1101 = vmatpush1.msra.mxu0 0.0
        %1102 = vmatprep.subr.mxu0 0.0
        %1103 = vmatpush1.msra.mxu0 0.0
        %1104 = vmatprep.subr.mxu0 0.0
        %1105 = vmatpush1.msra.mxu0 0.0
        %1106 = vmatprep.subr.mxu0 0.0
        %1107 = vmatpush1.msra.mxu0 0.0
        %1108 = vmatprep.subr.mxu0 0.0
        %1109 = vmatpush1.msra.mxu0 0.0
        %1110 = vmatprep.subr.mxu0 0.0
        %1111 = vmatpush1.msra.mxu0 0.0
        %1112 = vmatprep.subr.mxu0 0.0
        %1113 = vmatpush1.msra.mxu0 0.0
        %1114 = vmatprep.subr.mxu0 0.0
        %1115 = vmatpush1.msra.mxu0 0.0
        %1116 = vmatprep.subr.mxu0 0.0
        %1117 = vmatpush1.msra.mxu0 0.0
        %1118 = vmatprep.subr.mxu0 0.0
        %1119 = vmatpush1.msra.mxu0 0.0
        %1120 = vmatprep.subr.mxu0 0.0
        %1121 = vmatpush1.msra.mxu0 0.0
        %1122 = vmatprep.subr.mxu0 0.0
        %1123 = vmatpush1.msra.mxu0 0.0
        %1124 = vmatprep.subr.mxu0 0.0
        %1125 = vmatpush1.msra.mxu0 0.0
        %1126 = vmatprep.subr.mxu0 0.0
        %1127 = vmatpush1.msra.mxu0 0.0
        %1128 = vmatprep.subr.mxu0 0.0
        %1129 = vmatpush1.msra.mxu0 0.0
        %1130 = vmatprep.subr.mxu0 0.0
        %1131 = vmatpush1.msra.mxu0 0.0
        %1132 = vmatprep.subr.mxu0 0.0
        %1133 = vmatpush1.msra.mxu0 0.0
        %1134 = vmatprep.mubr.f32.mxu0 0.0
        %1135 = vmatmul.mubr.f32.gmra.mrb[0].mxu0 %v379
        %v1136 = vpop.f32.mrb[0].mxu0
        %v1137 = vadd.f32 0.0, %v1136
        %v1138 = vpop.f32.mrb[0].mxu0
        %1139 = vdwg.mxu0
        %s1140 = scalar_lea.vmem %s321, 24 [#allocation2]
        %1141 = vst.msk [vmem:[%s1140] sm:$0xff] %vm451, %v1137
        %s1142 = scalar_lea.vmem %s4, 96
        %v1143 = vld [vmem:[%s1142] sm:$0xff]
        %v1144 = vld [vmem:[%s1142 + $0x8] sm:$0xff]
        %v1145 = vld [vmem:[%s1142 + $0x10] sm:$0xff]
        %v1146 = vld [vmem:[%s1142 + $0x18] sm:$0xff]
        %1147 = vmatprep.subr.mxu0 0.0
        %1148 = vmatpush1.msra.mxu0 %v1143
        %1149 = vmatprep.subr.mxu0 0.0
        %1150 = vmatpush1.msra.mxu0 %v1144
        %1151 = vmatprep.subr.mxu0 0.0
        %1152 = vmatpush1.msra.mxu0 %v1145
        %1153 = vmatprep.subr.mxu0 0.0
        %1154 = vmatpush1.msra.mxu0 %v1146
        %1155 = vmatprep.subr.mxu0 0.0
        %1156 = vmatpush1.msra.mxu0 0.0
        %1157 = vmatprep.subr.mxu0 0.0
        %1158 = vmatpush1.msra.mxu0 0.0
        %1159 = vmatprep.subr.mxu0 0.0
        %1160 = vmatpush1.msra.mxu0 0.0
        %1161 = vmatprep.subr.mxu0 0.0
        %1162 = vmatpush1.msra.mxu0 0.0
        %1163 = vmatprep.subr.mxu0 0.0
        %1164 = vmatpush1.msra.mxu0 0.0
        %1165 = vmatprep.subr.mxu0 0.0
        %1166 = vmatpush1.msra.mxu0 0.0
        %1167 = vmatprep.subr.mxu0 0.0
        %1168 = vmatpush1.msra.mxu0 0.0
        %1169 = vmatprep.subr.mxu0 0.0
        %1170 = vmatpush1.msra.mxu0 0.0
        %1171 = vmatprep.subr.mxu0 0.0
        %1172 = vmatpush1.msra.mxu0 0.0
        %1173 = vmatprep.subr.mxu0 0.0
        %1174 = vmatpush1.msra.mxu0 0.0
        %1175 = vmatprep.subr.mxu0 0.0
        %1176 = vmatpush1.msra.mxu0 0.0
        %1177 = vmatprep.subr.mxu0 0.0
        %1178 = vmatpush1.msra.mxu0 0.0
        %1179 = vmatprep.subr.mxu0 0.0
        %1180 = vmatpush1.msra.mxu0 0.0
        %1181 = vmatprep.subr.mxu0 0.0
        %1182 = vmatpush1.msra.mxu0 0.0
        %1183 = vmatprep.subr.mxu0 0.0
        %1184 = vmatpush1.msra.mxu0 0.0
        %1185 = vmatprep.subr.mxu0 0.0
        %1186 = vmatpush1.msra.mxu0 0.0
        %1187 = vmatprep.subr.mxu0 0.0
        %1188 = vmatpush1.msra.mxu0 0.0
        %1189 = vmatprep.subr.mxu0 0.0
        %1190 = vmatpush1.msra.mxu0 0.0
        %1191 = vmatprep.subr.mxu0 0.0
        %1192 = vmatpush1.msra.mxu0 0.0
        %1193 = vmatprep.subr.mxu0 0.0
        %1194 = vmatpush1.msra.mxu0 0.0
        %1195 = vmatprep.subr.mxu0 0.0
        %1196 = vmatpush1.msra.mxu0 0.0
        %1197 = vmatprep.subr.mxu0 0.0
        %1198 = vmatpush1.msra.mxu0 0.0
        %1199 = vmatprep.subr.mxu0 0.0
        %1200 = vmatpush1.msra.mxu0 0.0
        %1201 = vmatprep.subr.mxu0 0.0
        %1202 = vmatpush1.msra.mxu0 0.0
        %1203 = vmatprep.subr.mxu0 0.0
        %1204 = vmatpush1.msra.mxu0 0.0
        %1205 = vmatprep.subr.mxu0 0.0
        %1206 = vmatpush1.msra.mxu0 0.0
        %1207 = vmatprep.subr.mxu0 0.0
        %1208 = vmatpush1.msra.mxu0 0.0
        %1209 = vmatprep.subr.mxu0 0.0
        %1210 = vmatpush1.msra.mxu0 0.0
        %1211 = vmatprep.mubr.f32.mxu0 0.0
        %1212 = vmatmul.mubr.f32.gmra.mrb[0].mxu0 %v379
        %v1213 = vpop.f32.mrb[0].mxu0
        %v1214 = vadd.f32 0.0, %v1213
        %v1215 = vpop.f32.mrb[0].mxu0
        %1216 = vdwg.mxu0
        %s1217 = scalar_lea.vmem %s327, 24 [#allocation3]
        %1218 = vst.msk [vmem:[%s1217] sm:$0xff] %vm451, %v1214
        %s1219 = scalar_lea.vmem %s5, 96
        %v1220 = vld [vmem:[%s1219] sm:$0xff]
        %v1221 = vld [vmem:[%s1219 + $0x8] sm:$0xff]
        %v1222 = vld [vmem:[%s1219 + $0x10] sm:$0xff]
        %v1223 = vld [vmem:[%s1219 + $0x18] sm:$0xff]
        %1224 = vmatprep.subr.mxu0 0.0
        %1225 = vmatpush1.msra.mxu0 %v1220
        %1226 = vmatprep.subr.mxu0 0.0
        %1227 = vmatpush1.msra.mxu0 %v1221
        %1228 = vmatprep.subr.mxu0 0.0
        %1229 = vmatpush1.msra.mxu0 %v1222
        %1230 = vmatprep.subr.mxu0 0.0
        %1231 = vmatpush1.msra.mxu0 %v1223
        %1232 = vmatprep.subr.mxu0 0.0
        %1233 = vmatpush1.msra.mxu0 0.0
        %1234 = vmatprep.subr.mxu0 0.0
        %1235 = vmatpush1.msra.mxu0 0.0
        %1236 = vmatprep.subr.mxu0 0.0
        %1237 = vmatpush1.msra.mxu0 0.0
        %1238 = vmatprep.subr.mxu0 0.0
        %1239 = vmatpush1.msra.mxu0 0.0
        %1240 = vmatprep.subr.mxu0 0.0
        %1241 = vmatpush1.msra.mxu0 0.0
        %1242 = vmatprep.subr.mxu0 0.0
        %1243 = vmatpush1.msra.mxu0 0.0
        %1244 = vmatprep.subr.mxu0 0.0
        %1245 = vmatpush1.msra.mxu0 0.0
        %1246 = vmatprep.subr.mxu0 0.0
        %1247 = vmatpush1.msra.mxu0 0.0
        %1248 = vmatprep.subr.mxu0 0.0
        %1249 = vmatpush1.msra.mxu0 0.0
        %1250 = vmatprep.subr.mxu0 0.0
        %1251 = vmatpush1.msra.mxu0 0.0
        %1252 = vmatprep.subr.mxu0 0.0
        %1253 = vmatpush1.msra.mxu0 0.0
        %1254 = vmatprep.subr.mxu0 0.0
        %1255 = vmatpush1.msra.mxu0 0.0
        %1256 = vmatprep.subr.mxu0 0.0
        %1257 = vmatpush1.msra.mxu0 0.0
        %1258 = vmatprep.subr.mxu0 0.0
        %1259 = vmatpush1.msra.mxu0 0.0
        %1260 = vmatprep.subr.mxu0 0.0
        %1261 = vmatpush1.msra.mxu0 0.0
        %1262 = vmatprep.subr.mxu0 0.0
        %1263 = vmatpush1.msra.mxu0 0.0
        %1264 = vmatprep.subr.mxu0 0.0
        %1265 = vmatpush1.msra.mxu0 0.0
        %1266 = vmatprep.subr.mxu0 0.0
        %1267 = vmatpush1.msra.mxu0 0.0
        %1268 = vmatprep.subr.mxu0 0.0
        %1269 = vmatpush1.msra.mxu0 0.0
        %1270 = vmatprep.subr.mxu0 0.0
        %1271 = vmatpush1.msra.mxu0 0.0
        %1272 = vmatprep.subr.mxu0 0.0
        %1273 = vmatpush1.msra.mxu0 0.0
        %1274 = vmatprep.subr.mxu0 0.0
        %1275 = vmatpush1.msra.mxu0 0.0
        %1276 = vmatprep.subr.mxu0 0.0
        %1277 = vmatpush1.msra.mxu0 0.0
        %1278 = vmatprep.subr.mxu0 0.0
        %1279 = vmatpush1.msra.mxu0 0.0
        %1280 = vmatprep.subr.mxu0 0.0
        %1281 = vmatpush1.msra.mxu0 0.0
        %1282 = vmatprep.subr.mxu0 0.0
        %1283 = vmatpush1.msra.mxu0 0.0
        %1284 = vmatprep.subr.mxu0 0.0
        %1285 = vmatpush1.msra.mxu0 0.0
        %1286 = vmatprep.subr.mxu0 0.0
        %1287 = vmatpush1.msra.mxu0 0.0
        %1288 = vmatprep.mubr.f32.mxu0 0.0
        %1289 = vmatmul.mubr.f32.gmra.mrb[0].mxu0 %v379
        %v1290 = vpop.f32.mrb[0].mxu0
        %v1291 = vadd.f32 0.0, %v1290
        %v1292 = vpop.f32.mrb[0].mxu0
        %1293 = vdwg.mxu0
        %s1294 = scalar_lea.vmem %s333, 24 [#allocation4]
        %1295 = vst.msk [vmem:[%s1294] sm:$0xff] %vm451, %v1291
        %s1296 = sand.u32 %s175, 1
        %s1297 = sand.u32 %s175, 1
        %s1298 = smul.addr %s1297, 32
        %s1299 = scalar_lea.vmem [#allocation2], %s1298
        %s1300 = sand.u32 %s203, 1
        %s1301 = sand.u32 %s203, 1
        %s1302 = smul.addr %s1301, 32
        %s1303 = scalar_lea.vmem [#allocation3], %s1302
        %s1304 = sand.u32 %s231, 1
        %s1305 = sand.u32 %s231, 1
        %s1306 = smul.addr %s1305, 32
        %s1307 = scalar_lea.vmem [#allocation4], %s1306
        // Predicated region
        $region45: #{tpu_custom_call.1} parent=43 // pred_check
          %p1308 = pneg %p185
        $region46: #{tpu_custom_call.1} parent=43 // pred_check_branch
          %1310 = sbr.rel (%p1308) target = $region48
        $region47: #{tpu_custom_call.1} parent=43 // pred_region
          %s1311 = smul.addr %s24, 8
          %s1312 = sadd.s32 %s25, %s1311
          %s1313 = smul.addr %s1312, 8
          %s1314 = scalar_lea.vmem %s6, %s1313
          // Predicated region
          $region49: #{tpu_custom_call.1} parent=47 // pred_check
            _
          $region50: #{tpu_custom_call.1} parent=47 // pred_check_branch
            %1316 = sbr.rel (0) target = $region52
          $region51: #{tpu_custom_call.1} parent=47 // pred_region
            // Predicated region
            $region53: #{tpu_custom_call.1} parent=51 // pred_check
              _
            $region54: #{tpu_custom_call.1} parent=51 // pred_check_branch
              %1318 = sbr.rel (0) target = $region56
            $region55: #{tpu_custom_call.1} parent=51 // pred_region
              // Predicated region
              $region68: #{tpu_custom_call.1} parent=55 // pred_check
                _
              $region69: #{tpu_custom_call.1} parent=55 // pred_check_branch
                %1339 = sbr.rel (0) target = $region71
              $region70: #{tpu_custom_call.1} parent=55 // pred_region
                loop: start=0, step=1, limit=1
                $region72: #{tpu_custom_call.1} parent=70 // loop_pre_header
                  _
                $region73: #{tpu_custom_call.1} parent=70 // loop_header
                  %s1341 = sphi 0, %s1345
                  %p1342 = scmp.ge.s32.totalorder %s1341, 1
                  %s1346 = sphi %s1299, %s1299
                  %s1347 = sphi %s1314, %s1314
                $region74: #{tpu_custom_call.1} parent=70 // loop_header_branch
                  %1344 = sbr.rel (%p1342) target = $region78
                $region75: #{tpu_custom_call.1} parent=70 // loop_body
                  %v1348 = vld [vmem:[%s1346] sm:$0xff]
                  %1349 = vst [vmem:[%s1347] sm:$0xff] %v1348
                  %v1350 = vld [vmem:[%s1346 + $0x8] sm:$0xff]
                  %1351 = vst [vmem:[%s1347 + $0x10] sm:$0xff] %v1350
                  %v1352 = vld [vmem:[%s1346 + $0x10] sm:$0xff]
                  %1353 = vst [vmem:[%s1347 + $0x20] sm:$0xff] %v1352
                  %v1354 = vld [vmem:[%s1346 + $0x18] sm:$0xff]
                  %1355 = vst [vmem:[%s1347 + $0x30] sm:$0xff] %v1354
                $region76: #{tpu_custom_call.1} parent=70 // loop_footer
                  %s1345 = sadd.s32 1, %s1341
                $region77: #{tpu_custom_call.1} parent=70 // loop_footer_branch
                  %1340 = sbr.rel target = $region73
                $region78: #{tpu_custom_call.1} parent=70 // loop_exit
                  _
              $region71: #{tpu_custom_call.1} parent=55 // pred_fallthru
                _
              // Predicated region
              $region79: #{tpu_custom_call.1} parent=55 // pred_check
                _
              $region80: #{tpu_custom_call.1} parent=55 // pred_check_branch
                %1357 = sbr.rel target = $region82
              $region81: #{tpu_custom_call.1} parent=55 // pred_region
                _
              $region82: #{tpu_custom_call.1} parent=55 // pred_fallthru
                _
            $region56: #{tpu_custom_call.1} parent=51 // pred_fallthru
              _
            // Predicated region
            $region57: #{tpu_custom_call.1} parent=51 // pred_check
              _
            $region58: #{tpu_custom_call.1} parent=51 // pred_check_branch
              %1320 = sbr.rel target = $region60
            $region59: #{tpu_custom_call.1} parent=51 // pred_region
              loop: start=0, step=1, limit=1
              $region61: #{tpu_custom_call.1} parent=59 // loop_pre_header
                _
              $region62: #{tpu_custom_call.1} parent=59 // loop_header
                %s1323 = sphi 0, %s1327
                %p1324 = scmp.ge.s32.totalorder %s1323, 1
                %s1328 = sphi %s1299, %s1299
                %s1329 = sphi %s1314, %s1314
              $region63: #{tpu_custom_call.1} parent=59 // loop_header_branch
                %1326 = sbr.rel (%p1324) target = $region67
              $region64: #{tpu_custom_call.1} parent=59 // loop_body
                %v1330 = vld [vmem:[%s1328] sm:$0xff]
                %1331 = vst [vmem:[%s1329] sm:$0xff] %v1330
                %v1332 = vld [vmem:[%s1328 + $0x8] sm:$0xff]
                %1333 = vst [vmem:[%s1329 + $0x10] sm:$0xff] %v1332
                %v1334 = vld [vmem:[%s1328 + $0x10] sm:$0xff]
                %1335 = vst [vmem:[%s1329 + $0x20] sm:$0xff] %v1334
                %v1336 = vld [vmem:[%s1328 + $0x18] sm:$0xff]
                %1337 = vst [vmem:[%s1329 + $0x30] sm:$0xff] %v1336
              $region65: #{tpu_custom_call.1} parent=59 // loop_footer
                %s1327 = sadd.s32 1, %s1323
              $region66: #{tpu_custom_call.1} parent=59 // loop_footer_branch
                %1322 = sbr.rel target = $region62
              $region67: #{tpu_custom_call.1} parent=59 // loop_exit
                _
            $region60: #{tpu_custom_call.1} parent=51 // pred_fallthru
              _
          $region52: #{tpu_custom_call.1} parent=47 // pred_fallthru
            _
          %1358 = vnop
        $region48: #{tpu_custom_call.1} parent=43 // pred_fallthru
          _
        // Predicated region
        $region83: #{tpu_custom_call.1} parent=43 // pred_check
          %p1359 = pneg %p213
        $region84: #{tpu_custom_call.1} parent=43 // pred_check_branch
          %1361 = sbr.rel (%p1359) target = $region86
        $region85: #{tpu_custom_call.1} parent=43 // pred_region
          %s1362 = smul.addr %s24, 8
          %s1363 = sadd.s32 %s25, %s1362
          %s1364 = smul.addr %s1363, 8
          %s1365 = scalar_lea.vmem %s7, %s1364
          // Predicated region
          $region87: #{tpu_custom_call.1} parent=85 // pred_check
            _
          $region88: #{tpu_custom_call.1} parent=85 // pred_check_branch
            %1367 = sbr.rel (0) target = $region90
          $region89: #{tpu_custom_call.1} parent=85 // pred_region
            // Predicated region
            $region91: #{tpu_custom_call.1} parent=89 // pred_check
              _
            $region92: #{tpu_custom_call.1} parent=89 // pred_check_branch
              %1369 = sbr.rel (0) target = $region94
            $region93: #{tpu_custom_call.1} parent=89 // pred_region
              // Predicated region
              $region106: #{tpu_custom_call.1} parent=93 // pred_check
                _
              $region107: #{tpu_custom_call.1} parent=93 // pred_check_branch
                %1390 = sbr.rel (0) target = $region109
              $region108: #{tpu_custom_call.1} parent=93 // pred_region
                loop: start=0, step=1, limit=1
                $region110: #{tpu_custom_call.1} parent=108 // loop_pre_header
                  _
                $region111: #{tpu_custom_call.1} parent=108 // loop_header
                  %s1392 = sphi 0, %s1396
                  %p1393 = scmp.ge.s32.totalorder %s1392, 1
                  %s1397 = sphi %s1303, %s1303
                  %s1398 = sphi %s1365, %s1365
                $region112: #{tpu_custom_call.1} parent=108 // loop_header_branch
                  %1395 = sbr.rel (%p1393) target = $region116
                $region113: #{tpu_custom_call.1} parent=108 // loop_body
                  %v1399 = vld [vmem:[%s1397] sm:$0xff]
                  %1400 = vst [vmem:[%s1398] sm:$0xff] %v1399
                  %v1401 = vld [vmem:[%s1397 + $0x8] sm:$0xff]
                  %1402 = vst [vmem:[%s1398 + $0x10] sm:$0xff] %v1401
                  %v1403 = vld [vmem:[%s1397 + $0x10] sm:$0xff]
                  %1404 = vst [vmem:[%s1398 + $0x20] sm:$0xff] %v1403
                  %v1405 = vld [vmem:[%s1397 + $0x18] sm:$0xff]
                  %1406 = vst [vmem:[%s1398 + $0x30] sm:$0xff] %v1405
                $region114: #{tpu_custom_call.1} parent=108 // loop_footer
                  %s1396 = sadd.s32 1, %s1392
                $region115: #{tpu_custom_call.1} parent=108 // loop_footer_branch
                  %1391 = sbr.rel target = $region111
                $region116: #{tpu_custom_call.1} parent=108 // loop_exit
                  _
              $region109: #{tpu_custom_call.1} parent=93 // pred_fallthru
                _
              // Predicated region
              $region117: #{tpu_custom_call.1} parent=93 // pred_check
                _
              $region118: #{tpu_custom_call.1} parent=93 // pred_check_branch
                %1408 = sbr.rel target = $region120
              $region119: #{tpu_custom_call.1} parent=93 // pred_region
                _
              $region120: #{tpu_custom_call.1} parent=93 // pred_fallthru
                _
            $region94: #{tpu_custom_call.1} parent=89 // pred_fallthru
              _
            // Predicated region
            $region95: #{tpu_custom_call.1} parent=89 // pred_check
              _
            $region96: #{tpu_custom_call.1} parent=89 // pred_check_branch
              %1371 = sbr.rel target = $region98
            $region97: #{tpu_custom_call.1} parent=89 // pred_region
              loop: start=0, step=1, limit=1
              $region99: #{tpu_custom_call.1} parent=97 // loop_pre_header
                _
              $region100: #{tpu_custom_call.1} parent=97 // loop_header
                %s1374 = sphi 0, %s1378
                %p1375 = scmp.ge.s32.totalorder %s1374, 1
                %s1379 = sphi %s1303, %s1303
                %s1380 = sphi %s1365, %s1365
              $region101: #{tpu_custom_call.1} parent=97 // loop_header_branch
                %1377 = sbr.rel (%p1375) target = $region105
              $region102: #{tpu_custom_call.1} parent=97 // loop_body
                %v1381 = vld [vmem:[%s1379] sm:$0xff]
                %1382 = vst [vmem:[%s1380] sm:$0xff] %v1381
                %v1383 = vld [vmem:[%s1379 + $0x8] sm:$0xff]
                %1384 = vst [vmem:[%s1380 + $0x10] sm:$0xff] %v1383
                %v1385 = vld [vmem:[%s1379 + $0x10] sm:$0xff]
                %1386 = vst [vmem:[%s1380 + $0x20] sm:$0xff] %v1385
                %v1387 = vld [vmem:[%s1379 + $0x18] sm:$0xff]
                %1388 = vst [vmem:[%s1380 + $0x30] sm:$0xff] %v1387
              $region103: #{tpu_custom_call.1} parent=97 // loop_footer
                %s1378 = sadd.s32 1, %s1374
              $region104: #{tpu_custom_call.1} parent=97 // loop_footer_branch
                %1373 = sbr.rel target = $region100
              $region105: #{tpu_custom_call.1} parent=97 // loop_exit
                _
            $region98: #{tpu_custom_call.1} parent=89 // pred_fallthru
              _
          $region90: #{tpu_custom_call.1} parent=85 // pred_fallthru
            _
          %1409 = vnop
        $region86: #{tpu_custom_call.1} parent=43 // pred_fallthru
          _
        // Predicated region
        $region121: #{tpu_custom_call.1} parent=43 // pred_check
          %p1410 = pneg %p241
        $region122: #{tpu_custom_call.1} parent=43 // pred_check_branch
          %1412 = sbr.rel (%p1410) target = $region124
        $region123: #{tpu_custom_call.1} parent=43 // pred_region
          %s1413 = smul.addr %s24, 8
          %s1414 = sadd.s32 %s25, %s1413
          %s1415 = smul.addr %s1414, 8
          %s1416 = scalar_lea.vmem %s8, %s1415
          // Predicated region
          $region125: #{tpu_custom_call.1} parent=123 // pred_check
            _
          $region126: #{tpu_custom_call.1} parent=123 // pred_check_branch
            %1418 = sbr.rel (0) target = $region128
          $region127: #{tpu_custom_call.1} parent=123 // pred_region
            // Predicated region
            $region129: #{tpu_custom_call.1} parent=127 // pred_check
              _
            $region130: #{tpu_custom_call.1} parent=127 // pred_check_branch
              %1420 = sbr.rel (0) target = $region132
            $region131: #{tpu_custom_call.1} parent=127 // pred_region
              // Predicated region
              $region144: #{tpu_custom_call.1} parent=131 // pred_check
                _
              $region145: #{tpu_custom_call.1} parent=131 // pred_check_branch
                %1441 = sbr.rel (0) target = $region147
              $region146: #{tpu_custom_call.1} parent=131 // pred_region
                loop: start=0, step=1, limit=1
                $region148: #{tpu_custom_call.1} parent=146 // loop_pre_header
                  _
                $region149: #{tpu_custom_call.1} parent=146 // loop_header
                  %s1443 = sphi 0, %s1447
                  %p1444 = scmp.ge.s32.totalorder %s1443, 1
                  %s1448 = sphi %s1307, %s1307
                  %s1449 = sphi %s1416, %s1416
                $region150: #{tpu_custom_call.1} parent=146 // loop_header_branch
                  %1446 = sbr.rel (%p1444) target = $region154
                $region151: #{tpu_custom_call.1} parent=146 // loop_body
                  %v1450 = vld [vmem:[%s1448] sm:$0xff]
                  %1451 = vst [vmem:[%s1449] sm:$0xff] %v1450
                  %v1452 = vld [vmem:[%s1448 + $0x8] sm:$0xff]
                  %1453 = vst [vmem:[%s1449 + $0x10] sm:$0xff] %v1452
                  %v1454 = vld [vmem:[%s1448 + $0x10] sm:$0xff]
                  %1455 = vst [vmem:[%s1449 + $0x20] sm:$0xff] %v1454
                  %v1456 = vld [vmem:[%s1448 + $0x18] sm:$0xff]
                  %1457 = vst [vmem:[%s1449 + $0x30] sm:$0xff] %v1456
                $region152: #{tpu_custom_call.1} parent=146 // loop_footer
                  %s1447 = sadd.s32 1, %s1443
                $region153: #{tpu_custom_call.1} parent=146 // loop_footer_branch
                  %1442 = sbr.rel target = $region149
                $region154: #{tpu_custom_call.1} parent=146 // loop_exit
                  _
              $region147: #{tpu_custom_call.1} parent=131 // pred_fallthru
                _
              // Predicated region
              $region155: #{tpu_custom_call.1} parent=131 // pred_check
                _
              $region156: #{tpu_custom_call.1} parent=131 // pred_check_branch
                %1459 = sbr.rel target = $region158
              $region157: #{tpu_custom_call.1} parent=131 // pred_region
                _
              $region158: #{tpu_custom_call.1} parent=131 // pred_fallthru
                _
            $region132: #{tpu_custom_call.1} parent=127 // pred_fallthru
              _
            // Predicated region
            $region133: #{tpu_custom_call.1} parent=127 // pred_check
              _
            $region134: #{tpu_custom_call.1} parent=127 // pred_check_branch
              %1422 = sbr.rel target = $region136
            $region135: #{tpu_custom_call.1} parent=127 // pred_region
              loop: start=0, step=1, limit=1
              $region137: #{tpu_custom_call.1} parent=135 // loop_pre_header
                _
              $region138: #{tpu_custom_call.1} parent=135 // loop_header
                %s1425 = sphi 0, %s1429
                %p1426 = scmp.ge.s32.totalorder %s1425, 1
                %s1430 = sphi %s1307, %s1307
                %s1431 = sphi %s1416, %s1416
              $region139: #{tpu_custom_call.1} parent=135 // loop_header_branch
                %1428 = sbr.rel (%p1426) target = $region143
              $region140: #{tpu_custom_call.1} parent=135 // loop_body
                %v1432 = vld [vmem:[%s1430] sm:$0xff]
                %1433 = vst [vmem:[%s1431] sm:$0xff] %v1432
                %v1434 = vld [vmem:[%s1430 + $0x8] sm:$0xff]
                %1435 = vst [vmem:[%s1431 + $0x10] sm:$0xff] %v1434
                %v1436 = vld [vmem:[%s1430 + $0x10] sm:$0xff]
                %1437 = vst [vmem:[%s1431 + $0x20] sm:$0xff] %v1436
                %v1438 = vld [vmem:[%s1430 + $0x18] sm:$0xff]
                %1439 = vst [vmem:[%s1431 + $0x30] sm:$0xff] %v1438
              $region141: #{tpu_custom_call.1} parent=135 // loop_footer
                %s1429 = sadd.s32 1, %s1425
              $region142: #{tpu_custom_call.1} parent=135 // loop_footer_branch
                %1424 = sbr.rel target = $region138
              $region143: #{tpu_custom_call.1} parent=135 // loop_exit
                _
            $region136: #{tpu_custom_call.1} parent=127 // pred_fallthru
              _
          $region128: #{tpu_custom_call.1} parent=123 // pred_fallthru
            _
          %1460 = vnop
        $region124: #{tpu_custom_call.1} parent=43 // pred_fallthru
          _
      $region44: #{tpu_custom_call.1} parent=5 // pred_fallthru
        _
      %p1461 = scmp.le.s32.totalorder 2, %s15
      // Predicated region
      $region159: #{tpu_custom_call.1} parent=5 // pred_check
        %p1462 = pneg %p1461
      $region160: #{tpu_custom_call.1} parent=5 // pred_check_branch
        %1464 = sbr.rel (%p1462) target = $region162
      $region161: #{tpu_custom_call.1} parent=5 // pred_region
        %s1465 = ssub.s32 %s15, 2
        // Predicated region
        $region163: #{tpu_custom_call.1} parent=161 // pred_check
          %p1466 = pneg %p191
        $region164: #{tpu_custom_call.1} parent=161 // pred_check_branch
          %1468 = sbr.rel (%p1466) target = $region166
        $region165: #{tpu_custom_call.1} parent=161 // pred_region
          %s1469 = sand.u32 %s176, 1
          %s1470 = sand.u32 %s176, 1
          %s1471 = smul.addr %s1470, 32
          %s1472 = scalar_lea.vmem [#allocation2], %s1471
        $region166: #{tpu_custom_call.1} parent=161 // pred_fallthru
          _
        // Predicated region
        $region167: #{tpu_custom_call.1} parent=161 // pred_check
          %p1473 = pneg %p219
        $region168: #{tpu_custom_call.1} parent=161 // pred_check_branch
          %1475 = sbr.rel (%p1473) target = $region170
        $region169: #{tpu_custom_call.1} parent=161 // pred_region
          %s1476 = sand.u32 %s204, 1
          %s1477 = sand.u32 %s204, 1
          %s1478 = smul.addr %s1477, 32
          %s1479 = scalar_lea.vmem [#allocation3], %s1478
        $region170: #{tpu_custom_call.1} parent=161 // pred_fallthru
          _
        // Predicated region
        $region171: #{tpu_custom_call.1} parent=161 // pred_check
          %p1480 = pneg %p247
        $region172: #{tpu_custom_call.1} parent=161 // pred_check_branch
          %1482 = sbr.rel (%p1480) target = $region174
        $region173: #{tpu_custom_call.1} parent=161 // pred_region
          %s1483 = sand.u32 %s232, 1
          %s1484 = sand.u32 %s232, 1
          %s1485 = smul.addr %s1484, 32
          %s1486 = scalar_lea.vmem [#allocation4], %s1485
        $region174: #{tpu_custom_call.1} parent=161 // pred_fallthru
          _
      $region162: #{tpu_custom_call.1} parent=5 // pred_fallthru
        _
    $region6: #{tpu_custom_call.1} parent=1 // loop_footer
      %s19 = sadd.s32 1, %s15
    $region7: #{tpu_custom_call.1} parent=1 // loop_footer_branch
      %14 = sbr.rel target = $region3
    $region8: #{tpu_custom_call.1} parent=1 // loop_exit
      _

</llo_original>
